<compile_context>
chip_gen: v6e
topology: v6e:2x2x1
jax: 0.10.0
libtpu: 0.0.40
codegen_flags: <defaults>
</compile_context>

<pallas_src>
import jax
import jax.numpy as jnp
from jax.experimental import pallas as pl
from jax.experimental.pallas import tpu as pltpu

EPS = 1e-5  # PyTorch nn.LayerNorm default


def _round_up(x, m):
    return (x + m - 1) // m * m


def _mlp_kernel(
    x_ref,
    w1_ref, b1_ref, g1_ref, be1_ref,
    w2_ref, b2_ref, g2_ref, be2_ref,
    w3_ref, b3_ref, g3_ref, be3_ref,
    wp_ref, bp_ref, gp_ref, bep_ref,
    o_ref,
):
    def ln_centered(hc, gamma, beta):
        # The row-mean is already folded into the (column-centered) weights/bias, so
        # only the variance cross-lane (XLU) reduction remains here.
        var = jnp.mean(hc * hc, axis=-1, keepdims=True)
        return hc * jax.lax.rsqrt(var + EPS) * gamma + beta

    def layer(h_bf16, w_ref, b_ref, g_ref, be_ref, relu):
        # bf16 operands -> native MXU path; f32 accumulation + f32 LayerNorm math.
        hc = jnp.dot(h_bf16, w_ref[...], preferred_element_type=jnp.float32) + b_ref[...]
        hc = ln_centered(hc, g_ref[...], be_ref[...])
        return jax.nn.relu(hc) if relu else hc

    h = layer(x_ref[...], w1_ref, b1_ref, g1_ref, be1_ref, relu=True)   # encoder 1
    h = layer(h.astype(jnp.bfloat16), w2_ref, b2_ref, g2_ref, be2_ref, relu=True)   # 2
    h = layer(h.astype(jnp.bfloat16), w3_ref, b3_ref, g3_ref, be3_ref, relu=True)   # 3
    h = layer(h.astype(jnp.bfloat16), wp_ref, bp_ref, gp_ref, bep_ref, relu=False)  # projector

    # Direct store of the full (tile_m, c_out) block -- no packing, so the wrapper does
    # no reshape/transpose and there is no extra HBM pass over the output.
    o_ref[...] = h.astype(o_ref.dtype)


def pointcloud_encoder_forward(points, params, *, tile_m=2048,
                               vmem_limit_bytes=48 * 1024 * 1024):
    """points: (B, N, C_in) float32. Returns (B, N, out_channels) float32."""
    B, N, c_in = points.shape
    M = B * N

    (w1, b1, g1, be1, w2, b2, g2, be2, w3, b3, g3, be3, wp, bp, gp, bep) = params
    c_out = wp.shape[1]

    # Fold the LayerNorm mean into each Linear: center every row of W (over the output
    # dim) and the bias.  Exact in real arithmetic; weights are then cast to bf16
    # (halves weight VMEM/DMA), bias / LayerNorm affine params stay f32.
    def fold(w, b):
        wc = (w - jnp.mean(w, axis=1, keepdims=True)).astype(jnp.bfloat16)
        bc = (b - jnp.mean(b)).astype(jnp.float32)
        return wc, bc

    w1c, b1c = fold(w1, b1)
    w2c, b2c = fold(w2, b2)
    w3c, b3c = fold(w3, b3)
    wpc, bpc = fold(wp, bp)
    kparams = (w1c, b1c, g1, be1, w2c, b2c, g2, be2,
               w3c, b3c, g3, be3, wpc, bpc, gp, bep)

    # Pre-cast the input to bf16 in the wrapper (halves input HBM DMA / VMEM buffers).
    x = points.reshape(M, c_in).astype(jnp.bfloat16)

    # Row tile: large (amortizes ~0.35us/step grid overhead and per-layer MXU weight
    # pushes) but (a) never bigger than the padded row count and (b) capped so there are
    # >= 2 tiles when possible, keeping both v7x TensorCores busy on the "parallel" axis.
    row_align = 16  # bf16 sublane tile (also a multiple of the f32 sublane tile of 8)
    tile_m = max(row_align, _round_up(min(tile_m, M), row_align))
    if M > row_align:
        tile_m = min(tile_m, _round_up(-(-M // 2), row_align))

    # Pad ragged row counts up to a tile multiple; rows are independent so pad rows
    # compute harmless values and are sliced away below.
    M_pad = _round_up(M, tile_m)
    if M_pad != M:
        x = jnp.pad(x, ((0, M_pad - M), (0, 0)))
    n_tiles = M_pad // tile_m

    def full_spec(arr):
        # Whole parameter resident in VMEM every grid step (constant index map -> no
        # re-DMA).  Total is only ~0.2 MiB of bf16 weights + f32 affine params.
        # TODO(synk): pipeline_mode=pl.Buffered(1) would drop the second (unused) buffer
        # copy of each parameter; skipped since it only buys ~0.2 MiB of headroom.
        return pl.BlockSpec(arr.shape, lambda i: (0, 0))

    grid_spec = pltpu.PrefetchScalarGridSpec(
        num_scalar_prefetch=0,
        grid=(n_tiles,),
        in_specs=[pl.BlockSpec((tile_m, c_in), lambda i: (i, 0))]
        + [full_spec(p) for p in kparams],
        out_specs=pl.BlockSpec((tile_m, c_out), lambda i: (i, 0)),
    )

    out = pl.pallas_call(
        _mlp_kernel,
        grid_spec=grid_spec,
        out_shape=jax.ShapeDtypeStruct((M_pad, c_out), jnp.float32),
        compiler_params=pltpu.CompilerParams(
            dimension_semantics=("parallel",),   # row tiles split across TCs (v7x)
            vmem_limit_bytes=vmem_limit_bytes,   # raise above the 16 MiB v5e default
        ),
    )(x, *kparams)

    return out[:M].reshape(B, N, c_out)


def make_params(key, in_channels, out_channels, layer_size=(64, 128, 256)):
    """Deterministic synthetic parameters. Linear weights stored transposed (in, out)."""
    dims = [in_channels, *layer_size, out_channels]
    keys = jax.random.split(key, 8)
    params = []
    for li in range(4):
        fan_in, fan_out = dims[li], dims[li + 1]
        bound = 1.0 / jnp.sqrt(jnp.float32(fan_in))
        w = jax.random.uniform(keys[2 * li], (fan_in, fan_out), jnp.float32, -bound, bound)
        b = jax.random.uniform(keys[2 * li + 1], (1, fan_out), jnp.float32, -bound, bound)
        # LayerNorm affine params (non-default so the check is meaningful)
        gamma = 1.0 + 0.01 * jnp.arange(fan_out, dtype=jnp.float32).reshape(1, fan_out)
        beta = 0.001 * jnp.arange(fan_out, dtype=jnp.float32).reshape(1, fan_out)
        params += [w, b, gamma, beta]
    return tuple(params)


def _layernorm(h, gamma, beta):
    mu = jnp.mean(h, axis=-1, keepdims=True)
    var = jnp.mean((h - mu) ** 2, axis=-1, keepdims=True)
    return (h - mu) * jax.lax.rsqrt(var + EPS) * gamma + beta


def reference_forward_f32(points, params):
    """Pure-f32 reference with the exact PyTorch module structure/semantics."""
    (w1, b1, g1, be1, w2, b2, g2, be2, w3, b3, g3, be3, wp, bp, gp, bep) = params
    x = points.reshape(-1, points.shape[-1]).astype(jnp.float32)
    h = jax.nn.relu(_layernorm(x @ w1 + b1, g1, be1))
    h = jax.nn.relu(_layernorm(h @ w2 + b2, g2, be2))
    h = jax.nn.relu(_layernorm(h @ w3 + b3, g3, be3))
    h = _layernorm(h @ wp + bp, gp, bep)
    return h.reshape(*points.shape[:-1], wp.shape[1])


def reference_forward_mixed(points, params):
    """Plain-JAX replica of the kernel's recipe (column-centered bf16 weights, f32
    accumulation, variance-only LayerNorm)."""
    (w1, b1, g1, be1, w2, b2, g2, be2, w3, b3, g3, be3, wp, bp, gp, bep) = params

    def layer(h, w, b, g, be, relu):
        wc = (w - jnp.mean(w, axis=1, keepdims=True)).astype(jnp.bfloat16)
        bc = b - jnp.mean(b)
        hc = jnp.dot(h.astype(jnp.bfloat16), wc, preferred_element_type=jnp.float32) + bc
        var = jnp.mean(hc * hc, axis=-1, keepdims=True)
        hc = hc * jax.lax.rsqrt(var + EPS) * g + be
        return jax.nn.relu(hc) if relu else hc

    x = points.reshape(-1, points.shape[-1]).astype(jnp.float32)
    h = layer(x, w1, b1, g1, be1, True)
    h = layer(h, w2, b2, g2, be2, True)
    h = layer(h, w3, b3, g3, be3, True)
    h = layer(h, wp, bp, gp, bep, False)
    return h.reshape(*points.shape[:-1], wp.shape[1])


if __name__ == "__main__":
    key = jax.random.PRNGKey(0)
    k_pts, k_par = jax.random.split(key)

    B, N, IN_CH, OUT_CH = 2, 16, 4, 32
    points = jax.random.normal(k_pts, (B, N, IN_CH), jnp.float32)
    params = make_params(k_par, IN_CH, OUT_CH)

    out = pointcloud_encoder_forward(points, params)
    out = jax.block_until_ready(out)
    assert out.shape == (B, N, OUT_CH)

    # Tight check: same mixed-precision recipe in plain JAX.
    ref_mixed = reference_forward_mixed(points, params)
    assert jnp.allclose(out, ref_mixed, atol=2e-3, rtol=2e-3), "mismatch vs mixed reference"

    # Drift bound vs the exact f32 PyTorch-structured forward (bf16-operand drift only).
    ref_f32 = reference_forward_f32(points, params)
    rel_err = jnp.linalg.norm(out - ref_f32) / jnp.linalg.norm(ref_f32)
    assert rel_err < 5e-2, f"bf16 drift vs f32 reference too large: {rel_err}"

    print("KERNEL_OK")
</pallas_src>

<mosaic_0001>
module attributes {stable_mosaic.version = 11 : i64} {
  func.func @_mlp_kernel(%arg0: i32, %arg1: memref<16x4xbf16, #tpu.memory_space<vmem>>, %arg2: memref<4x64xbf16, #tpu.memory_space<vmem>>, %arg3: memref<1x64xf32, #tpu.memory_space<vmem>>, %arg4: memref<1x64xf32, #tpu.memory_space<vmem>>, %arg5: memref<1x64xf32, #tpu.memory_space<vmem>>, %arg6: memref<64x128xbf16, #tpu.memory_space<vmem>>, %arg7: memref<1x128xf32, #tpu.memory_space<vmem>>, %arg8: memref<1x128xf32, #tpu.memory_space<vmem>>, %arg9: memref<1x128xf32, #tpu.memory_space<vmem>>, %arg10: memref<128x256xbf16, #tpu.memory_space<vmem>>, %arg11: memref<1x256xf32, #tpu.memory_space<vmem>>, %arg12: memref<1x256xf32, #tpu.memory_space<vmem>>, %arg13: memref<1x256xf32, #tpu.memory_space<vmem>>, %arg14: memref<256x32xbf16, #tpu.memory_space<vmem>>, %arg15: memref<1x32xf32, #tpu.memory_space<vmem>>, %arg16: memref<1x32xf32, #tpu.memory_space<vmem>>, %arg17: memref<1x32xf32, #tpu.memory_space<vmem>>, %arg18: memref<16x32xf32, #tpu.memory_space<vmem>>) attributes {dimension_semantics = [#tpu.dimension_semantics<parallel>], iteration_bounds = array<i64: 2>, scalar_prefetch = 0 : i64, scratch_operands = 0 : i64, tpu.core_type = #tpu.core_type<tc>, window_params = [{transform_indices = @transform_0, window_bounds = array<i64: 16, 4>}, {pipeline_mode = #tpu.pipeline_mode<synchronous>, transform_indices = @transform_1, window_bounds = array<i64: 4, 64>}, {pipeline_mode = #tpu.pipeline_mode<synchronous>, transform_indices = @transform_2, window_bounds = array<i64: 1, 64>}, {pipeline_mode = #tpu.pipeline_mode<synchronous>, transform_indices = @transform_3, window_bounds = array<i64: 1, 64>}, {pipeline_mode = #tpu.pipeline_mode<synchronous>, transform_indices = @transform_4, window_bounds = array<i64: 1, 64>}, {pipeline_mode = #tpu.pipeline_mode<synchronous>, transform_indices = @transform_5, window_bounds = array<i64: 64, 128>}, {pipeline_mode = #tpu.pipeline_mode<synchronous>, transform_indices = @transform_6, window_bounds = array<i64: 1, 128>}, {pipeline_mode = #tpu.pipeline_mode<synchronous>, transform_indices = @transform_7, window_bounds = array<i64: 1, 128>}, {pipeline_mode = #tpu.pipeline_mode<synchronous>, transform_indices = @transform_8, window_bounds = array<i64: 1, 128>}, {pipeline_mode = #tpu.pipeline_mode<synchronous>, transform_indices = @transform_9, window_bounds = array<i64: 128, 256>}, {pipeline_mode = #tpu.pipeline_mode<synchronous>, transform_indices = @transform_10, window_bounds = array<i64: 1, 256>}, {pipeline_mode = #tpu.pipeline_mode<synchronous>, transform_indices = @transform_11, window_bounds = array<i64: 1, 256>}, {pipeline_mode = #tpu.pipeline_mode<synchronous>, transform_indices = @transform_12, window_bounds = array<i64: 1, 256>}, {pipeline_mode = #tpu.pipeline_mode<synchronous>, transform_indices = @transform_13, window_bounds = array<i64: 256, 32>}, {pipeline_mode = #tpu.pipeline_mode<synchronous>, transform_indices = @transform_14, window_bounds = array<i64: 1, 32>}, {pipeline_mode = #tpu.pipeline_mode<synchronous>, transform_indices = @transform_15, window_bounds = array<i64: 1, 32>}, {pipeline_mode = #tpu.pipeline_mode<synchronous>, transform_indices = @transform_16, window_bounds = array<i64: 1, 32>}, {transform_indices = @transform_17, window_bounds = array<i64: 16, 32>}]} {
    %c0 = arith.constant 0 : index
    %c0_0 = arith.constant 0 : index
    %0 = vector.load %arg1[%c0, %c0_0] : memref<16x4xbf16, #tpu.memory_space<vmem>>, vector<16x4xbf16>
    %c0_1 = arith.constant 0 : index
    %c0_2 = arith.constant 0 : index
    %1 = vector.load %arg2[%c0_1, %c0_2] : memref<4x64xbf16, #tpu.memory_space<vmem>>, vector<4x64xbf16>
    %cst = arith.constant dense<0.000000e+00> : vector<16x64xf32>
    %2 = tpu.matmul %0, %1, %cst {dimension_numbers = #tpu.dot_dimension_numbers<[1], [0], [0], [1], [0, 0, 1, 1], [], []>} : vector<16x4xbf16>, vector<4x64xbf16>, vector<16x64xf32> -> vector<16x64xf32>
    %c0_3 = arith.constant 0 : index
    %c0_4 = arith.constant 0 : index
    %3 = vector.load %arg3[%c0_3, %c0_4] : memref<1x64xf32, #tpu.memory_space<vmem>>, vector<1x64xf32>
    %4 = vector.broadcast %3 : vector<1x64xf32> to vector<16x64xf32>
    %5 = arith.addf %2, %4 : vector<16x64xf32>
    %c0_5 = arith.constant 0 : index
    %c0_6 = arith.constant 0 : index
    %6 = vector.load %arg4[%c0_5, %c0_6] : memref<1x64xf32, #tpu.memory_space<vmem>>, vector<1x64xf32>
    %c0_7 = arith.constant 0 : index
    %c0_8 = arith.constant 0 : index
    %7 = vector.load %arg5[%c0_7, %c0_8] : memref<1x64xf32, #tpu.memory_space<vmem>>, vector<1x64xf32>
    %8 = arith.mulf %5, %5 : vector<16x64xf32>
    %cst_9 = arith.constant dense<0.000000e+00> : vector<16xf32>
    %9 = vector.multi_reduction <add>, %8, %cst_9 [1] : vector<16x64xf32> to vector<16xf32>
    %10 = vector.shape_cast %9 : vector<16xf32> to vector<16x1xf32>
    %cst_10 = arith.constant 6.400000e+01 : f32
    %11 = vector.broadcast %cst_10 : f32 to vector<16x1xf32>
    %12 = arith.divf %10, %11 : vector<16x1xf32>
    %cst_11 = arith.constant 9.99999974E-6 : f32
    %13 = vector.broadcast %cst_11 : f32 to vector<16x1xf32>
    %14 = arith.addf %12, %13 : vector<16x1xf32>
    %15 = math.rsqrt %14 : vector<16x1xf32>
    %16 = vector.broadcast %15 : vector<16x1xf32> to vector<16x64xf32>
    %17 = arith.mulf %5, %16 : vector<16x64xf32>
    %18 = vector.broadcast %6 : vector<1x64xf32> to vector<16x64xf32>
    %19 = arith.mulf %17, %18 : vector<16x64xf32>
    %20 = vector.broadcast %7 : vector<1x64xf32> to vector<16x64xf32>
    %21 = arith.addf %19, %20 : vector<16x64xf32>
    %cst_12 = arith.constant 0.000000e+00 : f32
    %22 = vector.broadcast %cst_12 : f32 to vector<16x64xf32>
    %23 = arith.maximumf %21, %22 : vector<16x64xf32>
    %24 = arith.truncf %23 : vector<16x64xf32> to vector<16x64xbf16>
    %c0_13 = arith.constant 0 : index
    %c0_14 = arith.constant 0 : index
    %25 = vector.load %arg6[%c0_13, %c0_14] : memref<64x128xbf16, #tpu.memory_space<vmem>>, vector<64x128xbf16>
    %cst_15 = arith.constant dense<0.000000e+00> : vector<16x128xf32>
    %26 = tpu.matmul %24, %25, %cst_15 {dimension_numbers = #tpu.dot_dimension_numbers<[1], [0], [0], [1], [0, 0, 1, 1], [], []>} : vector<16x64xbf16>, vector<64x128xbf16>, vector<16x128xf32> -> vector<16x128xf32>
    %c0_16 = arith.constant 0 : index
    %c0_17 = arith.constant 0 : index
    %27 = vector.load %arg7[%c0_16, %c0_17] : memref<1x128xf32, #tpu.memory_space<vmem>>, vector<1x128xf32>
    %28 = vector.broadcast %27 : vector<1x128xf32> to vector<16x128xf32>
    %29 = arith.addf %26, %28 : vector<16x128xf32>
    %c0_18 = arith.constant 0 : index
    %c0_19 = arith.constant 0 : index
    %30 = vector.load %arg8[%c0_18, %c0_19] : memref<1x128xf32, #tpu.memory_space<vmem>>, vector<1x128xf32>
    %c0_20 = arith.constant 0 : index
    %c0_21 = arith.constant 0 : index
    %31 = vector.load %arg9[%c0_20, %c0_21] : memref<1x128xf32, #tpu.memory_space<vmem>>, vector<1x128xf32>
    %32 = arith.mulf %29, %29 : vector<16x128xf32>
    %cst_22 = arith.constant dense<0.000000e+00> : vector<16xf32>
    %33 = vector.multi_reduction <add>, %32, %cst_22 [1] : vector<16x128xf32> to vector<16xf32>
    %34 = vector.shape_cast %33 : vector<16xf32> to vector<16x1xf32>
    %cst_23 = arith.constant 1.280000e+02 : f32
    %35 = vector.broadcast %cst_23 : f32 to vector<16x1xf32>
    %36 = arith.divf %34, %35 : vector<16x1xf32>
    %cst_24 = arith.constant 9.99999974E-6 : f32
    %37 = vector.broadcast %cst_24 : f32 to vector<16x1xf32>
    %38 = arith.addf %36, %37 : vector<16x1xf32>
    %39 = math.rsqrt %38 : vector<16x1xf32>
    %40 = vector.broadcast %39 : vector<16x1xf32> to vector<16x128xf32>
    %41 = arith.mulf %29, %40 : vector<16x128xf32>
    %42 = vector.broadcast %30 : vector<1x128xf32> to vector<16x128xf32>
    %43 = arith.mulf %41, %42 : vector<16x128xf32>
    %44 = vector.broadcast %31 : vector<1x128xf32> to vector<16x128xf32>
    %45 = arith.addf %43, %44 : vector<16x128xf32>
    %cst_25 = arith.constant 0.000000e+00 : f32
    %46 = vector.broadcast %cst_25 : f32 to vector<16x128xf32>
    %47 = arith.maximumf %45, %46 : vector<16x128xf32>
    %48 = arith.truncf %47 : vector<16x128xf32> to vector<16x128xbf16>
    %c0_26 = arith.constant 0 : index
    %c0_27 = arith.constant 0 : index
    %49 = vector.load %arg10[%c0_26, %c0_27] : memref<128x256xbf16, #tpu.memory_space<vmem>>, vector<128x256xbf16>
    %cst_28 = arith.constant dense<0.000000e+00> : vector<16x256xf32>
    %50 = tpu.matmul %48, %49, %cst_28 {dimension_numbers = #tpu.dot_dimension_numbers<[1], [0], [0], [1], [0, 0, 1, 1], [], []>} : vector<16x128xbf16>, vector<128x256xbf16>, vector<16x256xf32> -> vector<16x256xf32>
    %c0_29 = arith.constant 0 : index
    %c0_30 = arith.constant 0 : index
    %51 = vector.load %arg11[%c0_29, %c0_30] : memref<1x256xf32, #tpu.memory_space<vmem>>, vector<1x256xf32>
    %52 = vector.broadcast %51 : vector<1x256xf32> to vector<16x256xf32>
    %53 = arith.addf %50, %52 : vector<16x256xf32>
    %c0_31 = arith.constant 0 : index
    %c0_32 = arith.constant 0 : index
    %54 = vector.load %arg12[%c0_31, %c0_32] : memref<1x256xf32, #tpu.memory_space<vmem>>, vector<1x256xf32>
    %c0_33 = arith.constant 0 : index
    %c0_34 = arith.constant 0 : index
    %55 = vector.load %arg13[%c0_33, %c0_34] : memref<1x256xf32, #tpu.memory_space<vmem>>, vector<1x256xf32>
    %56 = arith.mulf %53, %53 : vector<16x256xf32>
    %cst_35 = arith.constant dense<0.000000e+00> : vector<16xf32>
    %57 = vector.multi_reduction <add>, %56, %cst_35 [1] : vector<16x256xf32> to vector<16xf32>
    %58 = vector.shape_cast %57 : vector<16xf32> to vector<16x1xf32>
    %cst_36 = arith.constant 2.560000e+02 : f32
    %59 = vector.broadcast %cst_36 : f32 to vector<16x1xf32>
    %60 = arith.divf %58, %59 : vector<16x1xf32>
    %cst_37 = arith.constant 9.99999974E-6 : f32
    %61 = vector.broadcast %cst_37 : f32 to vector<16x1xf32>
    %62 = arith.addf %60, %61 : vector<16x1xf32>
    %63 = math.rsqrt %62 : vector<16x1xf32>
    %64 = vector.broadcast %63 : vector<16x1xf32> to vector<16x256xf32>
    %65 = arith.mulf %53, %64 : vector<16x256xf32>
    %66 = vector.broadcast %54 : vector<1x256xf32> to vector<16x256xf32>
    %67 = arith.mulf %65, %66 : vector<16x256xf32>
    %68 = vector.broadcast %55 : vector<1x256xf32> to vector<16x256xf32>
    %69 = arith.addf %67, %68 : vector<16x256xf32>
    %cst_38 = arith.constant 0.000000e+00 : f32
    %70 = vector.broadcast %cst_38 : f32 to vector<16x256xf32>
    %71 = arith.maximumf %69, %70 : vector<16x256xf32>
    %72 = arith.truncf %71 : vector<16x256xf32> to vector<16x256xbf16>
    %c0_39 = arith.constant 0 : index
    %c0_40 = arith.constant 0 : index
    %73 = vector.load %arg14[%c0_39, %c0_40] : memref<256x32xbf16, #tpu.memory_space<vmem>>, vector<256x32xbf16>
    %cst_41 = arith.constant dense<0.000000e+00> : vector<16x32xf32>
    %74 = tpu.matmul %72, %73, %cst_41 {dimension_numbers = #tpu.dot_dimension_numbers<[1], [0], [0], [1], [0, 0, 1, 1], [], []>} : vector<16x256xbf16>, vector<256x32xbf16>, vector<16x32xf32> -> vector<16x32xf32>
    %c0_42 = arith.constant 0 : index
    %c0_43 = arith.constant 0 : index
    %75 = vector.load %arg15[%c0_42, %c0_43] : memref<1x32xf32, #tpu.memory_space<vmem>>, vector<1x32xf32>
    %76 = vector.broadcast %75 : vector<1x32xf32> to vector<16x32xf32>
    %77 = arith.addf %74, %76 : vector<16x32xf32>
    %c0_44 = arith.constant 0 : index
    %c0_45 = arith.constant 0 : index
    %78 = vector.load %arg16[%c0_44, %c0_45] : memref<1x32xf32, #tpu.memory_space<vmem>>, vector<1x32xf32>
    %c0_46 = arith.constant 0 : index
    %c0_47 = arith.constant 0 : index
    %79 = vector.load %arg17[%c0_46, %c0_47] : memref<1x32xf32, #tpu.memory_space<vmem>>, vector<1x32xf32>
    %80 = arith.mulf %77, %77 : vector<16x32xf32>
    %cst_48 = arith.constant dense<0.000000e+00> : vector<16xf32>
    %81 = vector.multi_reduction <add>, %80, %cst_48 [1] : vector<16x32xf32> to vector<16xf32>
    %82 = vector.shape_cast %81 : vector<16xf32> to vector<16x1xf32>
    %cst_49 = arith.constant 3.200000e+01 : f32
    %83 = vector.broadcast %cst_49 : f32 to vector<16x1xf32>
    %84 = arith.divf %82, %83 : vector<16x1xf32>
    %cst_50 = arith.constant 9.99999974E-6 : f32
    %85 = vector.broadcast %cst_50 : f32 to vector<16x1xf32>
    %86 = arith.addf %84, %85 : vector<16x1xf32>
    %87 = math.rsqrt %86 : vector<16x1xf32>
    %88 = vector.broadcast %87 : vector<16x1xf32> to vector<16x32xf32>
    %89 = arith.mulf %77, %88 : vector<16x32xf32>
    %90 = vector.broadcast %78 : vector<1x32xf32> to vector<16x32xf32>
    %91 = arith.mulf %89, %90 : vector<16x32xf32>
    %92 = vector.broadcast %79 : vector<1x32xf32> to vector<16x32xf32>
    %93 = arith.addf %91, %92 : vector<16x32xf32>
    %c0_51 = arith.constant 0 : index
    %c0_52 = arith.constant 0 : index
    %94 = vector.load %arg18[%c0_51, %c0_52] : memref<16x32xf32, #tpu.memory_space<vmem>>, vector<16x32xf32>
    tpu.vector_store %arg18[%c0_51, %c0_52], %93 {strides = array<i32>} : memref<16x32xf32, #tpu.memory_space<vmem>>, vector<16x32xf32>,
    return
  }
  func.func @transform_0(%arg0: i32) -> (i32, i32) {
    %c0_i32 = arith.constant 0 : i32
    %c0_i32_0 = arith.constant 0 : i32
    return %arg0, %c0_i32 : i32, i32
  }
  func.func @transform_1(%arg0: i32) -> (i32, i32) {
    %c0_i32 = arith.constant 0 : i32
    %c0_i32_0 = arith.constant 0 : i32
    %c0_i32_1 = arith.constant 0 : i32
    return %c0_i32, %c0_i32_0 : i32, i32
  }
  func.func @transform_2(%arg0: i32) -> (i32, i32) {
    %c0_i32 = arith.constant 0 : i32
    %c0_i32_0 = arith.constant 0 : i32
    %c0_i32_1 = arith.constant 0 : i32
    return %c0_i32, %c0_i32_0 : i32, i32
  }
  func.func @transform_3(%arg0: i32) -> (i32, i32) {
    %c0_i32 = arith.constant 0 : i32
    %c0_i32_0 = arith.constant 0 : i32
    %c0_i32_1 = arith.constant 0 : i32
    return %c0_i32, %c0_i32_0 : i32, i32
  }
  func.func @transform_4(%arg0: i32) -> (i32, i32) {
    %c0_i32 = arith.constant 0 : i32
    %c0_i32_0 = arith.constant 0 : i32
    %c0_i32_1 = arith.constant 0 : i32
    return %c0_i32, %c0_i32_0 : i32, i32
  }
  func.func @transform_5(%arg0: i32) -> (i32, i32) {
    %c0_i32 = arith.constant 0 : i32
    %c0_i32_0 = arith.constant 0 : i32
    %c0_i32_1 = arith.constant 0 : i32
    return %c0_i32, %c0_i32_0 : i32, i32
  }
  func.func @transform_6(%arg0: i32) -> (i32, i32) {
    %c0_i32 = arith.constant 0 : i32
    %c0_i32_0 = arith.constant 0 : i32
    %c0_i32_1 = arith.constant 0 : i32
    return %c0_i32, %c0_i32_0 : i32, i32
  }
  func.func @transform_7(%arg0: i32) -> (i32, i32) {
    %c0_i32 = arith.constant 0 : i32
    %c0_i32_0 = arith.constant 0 : i32
    %c0_i32_1 = arith.constant 0 : i32
    return %c0_i32, %c0_i32_0 : i32, i32
  }
  func.func @transform_8(%arg0: i32) -> (i32, i32) {
    %c0_i32 = arith.constant 0 : i32
    %c0_i32_0 = arith.constant 0 : i32
    %c0_i32_1 = arith.constant 0 : i32
    return %c0_i32, %c0_i32_0 : i32, i32
  }
  func.func @transform_9(%arg0: i32) -> (i32, i32) {
    %c0_i32 = arith.constant 0 : i32
    %c0_i32_0 = arith.constant 0 : i32
    %c0_i32_1 = arith.constant 0 : i32
    return %c0_i32, %c0_i32_0 : i32, i32
  }
  func.func @transform_10(%arg0: i32) -> (i32, i32) {
    %c0_i32 = arith.constant 0 : i32
    %c0_i32_0 = arith.constant 0 : i32
    %c0_i32_1 = arith.constant 0 : i32
    return %c0_i32, %c0_i32_0 : i32, i32
  }
  func.func @transform_11(%arg0: i32) -> (i32, i32) {
    %c0_i32 = arith.constant 0 : i32
    %c0_i32_0 = arith.constant 0 : i32
    %c0_i32_1 = arith.constant 0 : i32
    return %c0_i32, %c0_i32_0 : i32, i32
  }
  func.func @transform_12(%arg0: i32) -> (i32, i32) {
    %c0_i32 = arith.constant 0 : i32
    %c0_i32_0 = arith.constant 0 : i32
    %c0_i32_1 = arith.constant 0 : i32
    return %c0_i32, %c0_i32_0 : i32, i32
  }
  func.func @transform_13(%arg0: i32) -> (i32, i32) {
    %c0_i32 = arith.constant 0 : i32
    %c0_i32_0 = arith.constant 0 : i32
    %c0_i32_1 = arith.constant 0 : i32
    return %c0_i32, %c0_i32_0 : i32, i32
  }
  func.func @transform_14(%arg0: i32) -> (i32, i32) {
    %c0_i32 = arith.constant 0 : i32
    %c0_i32_0 = arith.constant 0 : i32
    %c0_i32_1 = arith.constant 0 : i32
    return %c0_i32, %c0_i32_0 : i32, i32
  }
  func.func @transform_15(%arg0: i32) -> (i32, i32) {
    %c0_i32 = arith.constant 0 : i32
    %c0_i32_0 = arith.constant 0 : i32
    %c0_i32_1 = arith.constant 0 : i32
    return %c0_i32, %c0_i32_0 : i32, i32
  }
  func.func @transform_16(%arg0: i32) -> (i32, i32) {
    %c0_i32 = arith.constant 0 : i32
    %c0_i32_0 = arith.constant 0 : i32
    %c0_i32_1 = arith.constant 0 : i32
    return %c0_i32, %c0_i32_0 : i32, i32
  }
  func.func @transform_17(%arg0: i32) -> (i32, i32) {
    %c0_i32 = arith.constant 0 : i32
    %c0_i32_0 = arith.constant 0 : i32
    return %arg0, %c0_i32 : i32, i32
  }
}

</mosaic_0001>

<llo_original>
// kernel: tpu_custom_call.1
$region0: #{tpu_custom_call.1}
  #allocation0 [shape = 'u32[]', space=smem, size = 0x4, offset = 0x4, fixed_abs, tag = 'smem constant byte address 0x4 - core index']
  #allocation1 [shape = 'u32[144,128]{1,0:T(1,128)}', space=vmem, size = 0x12000, scoped, tag = 'internal scratch']
  %s0 = inlined_call_operand.vmem [shape: bf16[32,4], index: 0, kind: input, shape index: {}]
  %s1 = inlined_call_operand.vmem [shape: bf16[4,64], index: 1, kind: input, shape index: {}]
  %s2 = inlined_call_operand.vmem [shape: f32[1,64], index: 2, kind: input, shape index: {}]
  %s3 = inlined_call_operand.hbm [shape: f32[1,64], index: 3, kind: input, shape index: {}]
  %s4 = inlined_call_operand.hbm [shape: f32[1,64], index: 4, kind: input, shape index: {}]
  %s5 = inlined_call_operand.vmem [shape: bf16[64,128], index: 5, kind: input, shape index: {}]
  %s6 = inlined_call_operand.hbm [shape: f32[1,128], index: 6, kind: input, shape index: {}]
  %s7 = inlined_call_operand.hbm [shape: f32[1,128], index: 7, kind: input, shape index: {}]
  %s8 = inlined_call_operand.hbm [shape: f32[1,128], index: 8, kind: input, shape index: {}]
  %s9 = inlined_call_operand.vmem [shape: bf16[128,256], index: 9, kind: input, shape index: {}]
  %s10 = inlined_call_operand.vmem [shape: f32[1,256], index: 10, kind: input, shape index: {}]
  %s11 = inlined_call_operand.vmem [shape: f32[1,256], index: 11, kind: input, shape index: {}]
  %s12 = inlined_call_operand.vmem [shape: f32[1,256], index: 12, kind: input, shape index: {}]
  %s13 = inlined_call_operand.vmem [shape: bf16[256,32], index: 13, kind: input, shape index: {}]
  %s14 = inlined_call_operand.vmem [shape: f32[1,32], index: 14, kind: input, shape index: {}]
  %s15 = inlined_call_operand.vmem [shape: f32[1,32], index: 15, kind: input, shape index: {}]
  %s16 = inlined_call_operand.vmem [shape: f32[1,32], index: 16, kind: input, shape index: {}]
  %s17 = inlined_call_operand.hbm [shape: f32[32,32], index: 17, kind: output, shape index: {}]
  %s18 = sld [smem:[#allocation0]]
  $region121: #{tpu_custom_call.1} parent=0
    _
  %s20 = ssub.s32 1, %s18
  %s21 = scalar_select 0, %s20, %s18
  $region1: #{tpu_custom_call.1} parent=0
    #allocation2 [shape = 'u8[512]{0}', space=vmem, size = 0x400, scoped, tag = 'input window, operand 3, single buffered']
    #allocation3 [shape = 's32[2]{0}', space=sflag, size = 0x8, scoped, tag = 'scoped memory for tpu_custom_call.1']
    #allocation4 [shape = 's32[2]{0}', space=sflag, size = 0x8, scoped, tag = 'scoped memory for tpu_custom_call.1']
    #allocation5 [shape = 'u8[512]{0}', space=vmem, size = 0x400, scoped, tag = 'input window, operand 4, single buffered']
    #allocation6 [shape = 's32[1]{0}', space=sflag, size = 0x4, scoped, tag = 'scoped memory for tpu_custom_call.1']
    #allocation7 [shape = 'u8[512]{0}', space=vmem, size = 0x400, scoped, tag = 'input window, operand 6, single buffered']
    #allocation8 [shape = 'u8[512]{0}', space=vmem, size = 0x400, scoped, tag = 'input window, operand 7, single buffered']
    #allocation9 [shape = 's32[1]{0}', space=sflag, size = 0x4, scoped, tag = 'scoped memory for tpu_custom_call.1']
    #allocation10 [shape = 'u8[512]{0}', space=vmem, size = 0x400, scoped, tag = 'input window, operand 8, single buffered']
    #allocation11 [shape = 'u8[16384]{0}', space=vmem, size = 0x4000, scoped, tag = 'output window, operand 0']
    %22 = vsyncpa [#allocation3], 0
    %23 = vsyncpa [#allocation6], 0
    %24 = vsyncpa [#allocation9], 0
    %25 = vsyncpa [#allocation4], 0
    %s26 = scalar_lea.sflag [#allocation4], 1
    %27 = vsyncpa %s26, 0
    loop: start=0, step=1, limit=4
    $region2: #{tpu_custom_call.1} parent=1 // loop_pre_header
      _
    $region3: #{tpu_custom_call.1} parent=1 // loop_header
      %s29 = sphi 0, %s33
      %p30 = scmp.ge.s32.totalorder %s29, 4
      %s39 = sphi 0, %s41
      %s42 = sphi 0, %s39
      %s43 = sphi 0, %s42
      %s59 = sphi 0, %s43
      %s63 = sphi 0, %s63
      %s65 = sphi 0, %s63
      %s66 = sphi 0, %s65
      %s80 = sphi 0, %s66
      %s84 = sphi 0, %s84
      %s86 = sphi 0, %s84
      %s87 = sphi 0, %s86
      %s101 = sphi 0, %s87
      %s105 = sphi 0, %s105
      %s107 = sphi 0, %s105
      %s108 = sphi 0, %s107
      %s122 = sphi 0, %s108
      %s126 = sphi 0, %s126
      %s128 = sphi 0, %s126
      %s129 = sphi 0, %s128
      %s143 = sphi 0, %s129
      %s147 = sphi 0, %s147
      %s149 = sphi 0, %s147
      %s150 = sphi 0, %s149
      %s164 = sphi 0, %s150
      %s168 = sphi 0, %s168
      %s170 = sphi 0, %s168
      %s171 = sphi 0, %s170
      %s185 = sphi 0, %s171
      %s189 = sphi 0, %s189
      %s191 = sphi 0, %s189
      %s192 = sphi 0, %s191
      %s206 = sphi 0, %s192
      %s210 = sphi 0, %s210
      %s212 = sphi 0, %s210
      %s213 = sphi 0, %s212
      %s227 = sphi 0, %s213
      %s231 = sphi 0, %s231
      %s233 = sphi 0, %s231
      %s234 = sphi 0, %s233
      %s248 = sphi 0, %s234
      %s252 = sphi 0, %s252
      %s254 = sphi 0, %s252
      %s255 = sphi 0, %s254
      %s269 = sphi 0, %s255
      %s273 = sphi 0, %s273
      %s275 = sphi 0, %s273
      %s276 = sphi 0, %s275
      %s290 = sphi 0, %s276
      %s294 = sphi 0, %s294
      %s296 = sphi 0, %s294
      %s297 = sphi 0, %s296
      %s311 = sphi 0, %s297
      %s315 = sphi 0, %s315
      %s317 = sphi 0, %s315
      %s318 = sphi 0, %s317
      %s332 = sphi 0, %s318
      %s336 = sphi 0, %s336
      %s338 = sphi 0, %s336
      %s339 = sphi 0, %s338
      %s353 = sphi 0, %s339
      %s357 = sphi 0, %s357
      %s359 = sphi 0, %s357
      %s360 = sphi 0, %s359
      %s374 = sphi 0, %s360
      %s378 = sphi 0, %s378
      %s380 = sphi 0, %s378
      %s381 = sphi 0, %s380
      %s395 = sphi 0, %s381
      %s401 = sphi 0, %s403
      %s404 = sphi 0, %s401
      %s405 = sphi 0, %s404
      %s421 = sphi 0, %s405
    $region4: #{tpu_custom_call.1} parent=1 // loop_header_branch
      %32 = sbr.rel (%p30) target = $region8
    $region5: #{tpu_custom_call.1} parent=1 // loop_body
      %s34 = ssub.s32 %s29, 1
      %s35 = ssub.s32 %s29, 2
      %s36 = sadd.s32 %s29, 1
      %s37 = ssub.s32 %s29, %s36
      %p38 = scmp.eq.s32.totalorder %s37, 0
      %s40 = sadd.s32 %s39, 1
      %s41 = scalar_select %p38, %s39, %s40
      %p44 = pneg %p38
      %p45 = scmp.eq.s32.totalorder %s29, 1
      %p46 = por %p44, %p45
      %p47 = scmp.ne.s32.totalorder %s39, %s42
      %p48 = scmp.eq.s32.totalorder %s29, 0
      %p49 = por %p47, %p48
      %p50 = scmp.ne.s32.totalorder %s39, %s42
      %p51 = scmp.eq.s32.totalorder %s34, 1
      %p52 = por %p50, %p51
      %p53 = scmp.ne.s32.totalorder %s42, %s43
      %p54 = scmp.eq.s32.totalorder %s34, 0
      %p55 = por %p53, %p54
      %p56 = scmp.ne.s32.totalorder %s42, %s43
      %p57 = scmp.eq.s32.totalorder %s35, 1
      %p58 = por %p56, %p57
      %p60 = scmp.ne.s32.totalorder %s43, %s59
      %p61 = scmp.eq.s32.totalorder %s35, 0
      %p62 = por %p60, %p61
      %s64 = sadd.s32 %s63, 1
      %p67 = scmp.eq.s32.totalorder %s29, 1
      %p68 = scmp.ne.s32.totalorder %s63, %s65
      %p69 = scmp.eq.s32.totalorder %s29, 0
      %p70 = por %p68, %p69
      %p71 = scmp.ne.s32.totalorder %s63, %s65
      %p72 = scmp.eq.s32.totalorder %s34, 1
      %p73 = por %p71, %p72
      %p74 = scmp.ne.s32.totalorder %s65, %s66
      %p75 = scmp.eq.s32.totalorder %s34, 0
      %p76 = por %p74, %p75
      %p77 = scmp.ne.s32.totalorder %s65, %s66
      %p78 = scmp.eq.s32.totalorder %s35, 1
      %p79 = por %p77, %p78
      %p81 = scmp.ne.s32.totalorder %s66, %s80
      %p82 = scmp.eq.s32.totalorder %s35, 0
      %p83 = por %p81, %p82
      %s85 = sadd.s32 %s84, 1
      %p88 = scmp.eq.s32.totalorder %s29, 1
      %p89 = scmp.ne.s32.totalorder %s84, %s86
      %p90 = scmp.eq.s32.totalorder %s29, 0
      %p91 = por %p89, %p90
      %p92 = scmp.ne.s32.totalorder %s84, %s86
      %p93 = scmp.eq.s32.totalorder %s34, 1
      %p94 = por %p92, %p93
      %p95 = scmp.ne.s32.totalorder %s86, %s87
      %p96 = scmp.eq.s32.totalorder %s34, 0
      %p97 = por %p95, %p96
      %p98 = scmp.ne.s32.totalorder %s86, %s87
      %p99 = scmp.eq.s32.totalorder %s35, 1
      %p100 = por %p98, %p99
      %p102 = scmp.ne.s32.totalorder %s87, %s101
      %p103 = scmp.eq.s32.totalorder %s35, 0
      %p104 = por %p102, %p103
      %s106 = sadd.s32 %s105, 1
      %p109 = scmp.eq.s32.totalorder %s29, 1
      %p110 = scmp.ne.s32.totalorder %s105, %s107
      %p111 = scmp.eq.s32.totalorder %s29, 0
      %p112 = por %p110, %p111
      %p113 = scmp.ne.s32.totalorder %s105, %s107
      %p114 = scmp.eq.s32.totalorder %s34, 1
      %p115 = por %p113, %p114
      %p116 = scmp.ne.s32.totalorder %s107, %s108
      %p117 = scmp.eq.s32.totalorder %s34, 0
      %p118 = por %p116, %p117
      %p119 = scmp.ne.s32.totalorder %s107, %s108
      %p120 = scmp.eq.s32.totalorder %s35, 1
      %p121 = por %p119, %p120
      %p123 = scmp.ne.s32.totalorder %s108, %s122
      %p124 = scmp.eq.s32.totalorder %s35, 0
      %p125 = por %p123, %p124
      %s127 = sadd.s32 %s126, 1
      %p130 = scmp.eq.s32.totalorder %s29, 1
      %p131 = scmp.ne.s32.totalorder %s126, %s128
      %p132 = scmp.eq.s32.totalorder %s29, 0
      %p133 = por %p131, %p132
      %p134 = scmp.ne.s32.totalorder %s126, %s128
      %p135 = scmp.eq.s32.totalorder %s34, 1
      %p136 = por %p134, %p135
      %p137 = scmp.ne.s32.totalorder %s128, %s129
      %p138 = scmp.eq.s32.totalorder %s34, 0
      %p139 = por %p137, %p138
      %p140 = scmp.ne.s32.totalorder %s128, %s129
      %p141 = scmp.eq.s32.totalorder %s35, 1
      %p142 = por %p140, %p141
      %p144 = scmp.ne.s32.totalorder %s129, %s143
      %p145 = scmp.eq.s32.totalorder %s35, 0
      %p146 = por %p144, %p145
      %s148 = sadd.s32 %s147, 1
      %p151 = scmp.eq.s32.totalorder %s29, 1
      %p152 = scmp.ne.s32.totalorder %s147, %s149
      %p153 = scmp.eq.s32.totalorder %s29, 0
      %p154 = por %p152, %p153
      %p155 = scmp.ne.s32.totalorder %s147, %s149
      %p156 = scmp.eq.s32.totalorder %s34, 1
      %p157 = por %p155, %p156
      %p158 = scmp.ne.s32.totalorder %s149, %s150
      %p159 = scmp.eq.s32.totalorder %s34, 0
      %p160 = por %p158, %p159
      %p161 = scmp.ne.s32.totalorder %s149, %s150
      %p162 = scmp.eq.s32.totalorder %s35, 1
      %p163 = por %p161, %p162
      %p165 = scmp.ne.s32.totalorder %s150, %s164
      %p166 = scmp.eq.s32.totalorder %s35, 0
      %p167 = por %p165, %p166
      %s169 = sadd.s32 %s168, 1
      %p172 = scmp.eq.s32.totalorder %s29, 1
      %p173 = scmp.ne.s32.totalorder %s168, %s170
      %p174 = scmp.eq.s32.totalorder %s29, 0
      %p175 = por %p173, %p174
      %p176 = scmp.ne.s32.totalorder %s168, %s170
      %p177 = scmp.eq.s32.totalorder %s34, 1
      %p178 = por %p176, %p177
      %p179 = scmp.ne.s32.totalorder %s170, %s171
      %p180 = scmp.eq.s32.totalorder %s34, 0
      %p181 = por %p179, %p180
      %p182 = scmp.ne.s32.totalorder %s170, %s171
      %p183 = scmp.eq.s32.totalorder %s35, 1
      %p184 = por %p182, %p183
      %p186 = scmp.ne.s32.totalorder %s171, %s185
      %p187 = scmp.eq.s32.totalorder %s35, 0
      %p188 = por %p186, %p187
      %s190 = sadd.s32 %s189, 1
      %p193 = scmp.eq.s32.totalorder %s29, 1
      %p194 = scmp.ne.s32.totalorder %s189, %s191
      %p195 = scmp.eq.s32.totalorder %s29, 0
      %p196 = por %p194, %p195
      %p197 = scmp.ne.s32.totalorder %s189, %s191
      %p198 = scmp.eq.s32.totalorder %s34, 1
      %p199 = por %p197, %p198
      %p200 = scmp.ne.s32.totalorder %s191, %s192
      %p201 = scmp.eq.s32.totalorder %s34, 0
      %p202 = por %p200, %p201
      %p203 = scmp.ne.s32.totalorder %s191, %s192
      %p204 = scmp.eq.s32.totalorder %s35, 1
      %p205 = por %p203, %p204
      %p207 = scmp.ne.s32.totalorder %s192, %s206
      %p208 = scmp.eq.s32.totalorder %s35, 0
      %p209 = por %p207, %p208
      %s211 = sadd.s32 %s210, 1
      %p214 = scmp.eq.s32.totalorder %s29, 1
      %p215 = scmp.ne.s32.totalorder %s210, %s212
      %p216 = scmp.eq.s32.totalorder %s29, 0
      %p217 = por %p215, %p216
      %p218 = scmp.ne.s32.totalorder %s210, %s212
      %p219 = scmp.eq.s32.totalorder %s34, 1
      %p220 = por %p218, %p219
      %p221 = scmp.ne.s32.totalorder %s212, %s213
      %p222 = scmp.eq.s32.totalorder %s34, 0
      %p223 = por %p221, %p222
      %p224 = scmp.ne.s32.totalorder %s212, %s213
      %p225 = scmp.eq.s32.totalorder %s35, 1
      %p226 = por %p224, %p225
      %p228 = scmp.ne.s32.totalorder %s213, %s227
      %p229 = scmp.eq.s32.totalorder %s35, 0
      %p230 = por %p228, %p229
      %s232 = sadd.s32 %s231, 1
      %p235 = scmp.eq.s32.totalorder %s29, 1
      %p236 = scmp.ne.s32.totalorder %s231, %s233
      %p237 = scmp.eq.s32.totalorder %s29, 0
      %p238 = por %p236, %p237
      %p239 = scmp.ne.s32.totalorder %s231, %s233
      %p240 = scmp.eq.s32.totalorder %s34, 1
      %p241 = por %p239, %p240
      %p242 = scmp.ne.s32.totalorder %s233, %s234
      %p243 = scmp.eq.s32.totalorder %s34, 0
      %p244 = por %p242, %p243
      %p245 = scmp.ne.s32.totalorder %s233, %s234
      %p246 = scmp.eq.s32.totalorder %s35, 1
      %p247 = por %p245, %p246
      %p249 = scmp.ne.s32.totalorder %s234, %s248
      %p250 = scmp.eq.s32.totalorder %s35, 0
      %p251 = por %p249, %p250
      %s253 = sadd.s32 %s252, 1
      %p256 = scmp.eq.s32.totalorder %s29, 1
      %p257 = scmp.ne.s32.totalorder %s252, %s254
      %p258 = scmp.eq.s32.totalorder %s29, 0
      %p259 = por %p257, %p258
      %p260 = scmp.ne.s32.totalorder %s252, %s254
      %p261 = scmp.eq.s32.totalorder %s34, 1
      %p262 = por %p260, %p261
      %p263 = scmp.ne.s32.totalorder %s254, %s255
      %p264 = scmp.eq.s32.totalorder %s34, 0
      %p265 = por %p263, %p264
      %p266 = scmp.ne.s32.totalorder %s254, %s255
      %p267 = scmp.eq.s32.totalorder %s35, 1
      %p268 = por %p266, %p267
      %p270 = scmp.ne.s32.totalorder %s255, %s269
      %p271 = scmp.eq.s32.totalorder %s35, 0
      %p272 = por %p270, %p271
      %s274 = sadd.s32 %s273, 1
      %p277 = scmp.eq.s32.totalorder %s29, 1
      %p278 = scmp.ne.s32.totalorder %s273, %s275
      %p279 = scmp.eq.s32.totalorder %s29, 0
      %p280 = por %p278, %p279
      %p281 = scmp.ne.s32.totalorder %s273, %s275
      %p282 = scmp.eq.s32.totalorder %s34, 1
      %p283 = por %p281, %p282
      %p284 = scmp.ne.s32.totalorder %s275, %s276
      %p285 = scmp.eq.s32.totalorder %s34, 0
      %p286 = por %p284, %p285
      %p287 = scmp.ne.s32.totalorder %s275, %s276
      %p288 = scmp.eq.s32.totalorder %s35, 1
      %p289 = por %p287, %p288
      %p291 = scmp.ne.s32.totalorder %s276, %s290
      %p292 = scmp.eq.s32.totalorder %s35, 0
      %p293 = por %p291, %p292
      %s295 = sadd.s32 %s294, 1
      %p298 = scmp.eq.s32.totalorder %s29, 1
      %p299 = scmp.ne.s32.totalorder %s294, %s296
      %p300 = scmp.eq.s32.totalorder %s29, 0
      %p301 = por %p299, %p300
      %p302 = scmp.ne.s32.totalorder %s294, %s296
      %p303 = scmp.eq.s32.totalorder %s34, 1
      %p304 = por %p302, %p303
      %p305 = scmp.ne.s32.totalorder %s296, %s297
      %p306 = scmp.eq.s32.totalorder %s34, 0
      %p307 = por %p305, %p306
      %p308 = scmp.ne.s32.totalorder %s296, %s297
      %p309 = scmp.eq.s32.totalorder %s35, 1
      %p310 = por %p308, %p309
      %p312 = scmp.ne.s32.totalorder %s297, %s311
      %p313 = scmp.eq.s32.totalorder %s35, 0
      %p314 = por %p312, %p313
      %s316 = sadd.s32 %s315, 1
      %p319 = scmp.eq.s32.totalorder %s29, 1
      %p320 = scmp.ne.s32.totalorder %s315, %s317
      %p321 = scmp.eq.s32.totalorder %s29, 0
      %p322 = por %p320, %p321
      %p323 = scmp.ne.s32.totalorder %s315, %s317
      %p324 = scmp.eq.s32.totalorder %s34, 1
      %p325 = por %p323, %p324
      %p326 = scmp.ne.s32.totalorder %s317, %s318
      %p327 = scmp.eq.s32.totalorder %s34, 0
      %p328 = por %p326, %p327
      %p329 = scmp.ne.s32.totalorder %s317, %s318
      %p330 = scmp.eq.s32.totalorder %s35, 1
      %p331 = por %p329, %p330
      %p333 = scmp.ne.s32.totalorder %s318, %s332
      %p334 = scmp.eq.s32.totalorder %s35, 0
      %p335 = por %p333, %p334
      %s337 = sadd.s32 %s336, 1
      %p340 = scmp.eq.s32.totalorder %s29, 1
      %p341 = scmp.ne.s32.totalorder %s336, %s338
      %p342 = scmp.eq.s32.totalorder %s29, 0
      %p343 = por %p341, %p342
      %p344 = scmp.ne.s32.totalorder %s336, %s338
      %p345 = scmp.eq.s32.totalorder %s34, 1
      %p346 = por %p344, %p345
      %p347 = scmp.ne.s32.totalorder %s338, %s339
      %p348 = scmp.eq.s32.totalorder %s34, 0
      %p349 = por %p347, %p348
      %p350 = scmp.ne.s32.totalorder %s338, %s339
      %p351 = scmp.eq.s32.totalorder %s35, 1
      %p352 = por %p350, %p351
      %p354 = scmp.ne.s32.totalorder %s339, %s353
      %p355 = scmp.eq.s32.totalorder %s35, 0
      %p356 = por %p354, %p355
      %s358 = sadd.s32 %s357, 1
      %p361 = scmp.eq.s32.totalorder %s29, 1
      %p362 = scmp.ne.s32.totalorder %s357, %s359
      %p363 = scmp.eq.s32.totalorder %s29, 0
      %p364 = por %p362, %p363
      %p365 = scmp.ne.s32.totalorder %s357, %s359
      %p366 = scmp.eq.s32.totalorder %s34, 1
      %p367 = por %p365, %p366
      %p368 = scmp.ne.s32.totalorder %s359, %s360
      %p369 = scmp.eq.s32.totalorder %s34, 0
      %p370 = por %p368, %p369
      %p371 = scmp.ne.s32.totalorder %s359, %s360
      %p372 = scmp.eq.s32.totalorder %s35, 1
      %p373 = por %p371, %p372
      %p375 = scmp.ne.s32.totalorder %s360, %s374
      %p376 = scmp.eq.s32.totalorder %s35, 0
      %p377 = por %p375, %p376
      %s379 = sadd.s32 %s378, 1
      %p382 = scmp.eq.s32.totalorder %s29, 1
      %p383 = scmp.ne.s32.totalorder %s378, %s380
      %p384 = scmp.eq.s32.totalorder %s29, 0
      %p385 = por %p383, %p384
      %p386 = scmp.ne.s32.totalorder %s378, %s380
      %p387 = scmp.eq.s32.totalorder %s34, 1
      %p388 = por %p386, %p387
      %p389 = scmp.ne.s32.totalorder %s380, %s381
      %p390 = scmp.eq.s32.totalorder %s34, 0
      %p391 = por %p389, %p390
      %p392 = scmp.ne.s32.totalorder %s380, %s381
      %p393 = scmp.eq.s32.totalorder %s35, 1
      %p394 = por %p392, %p393
      %p396 = scmp.ne.s32.totalorder %s381, %s395
      %p397 = scmp.eq.s32.totalorder %s35, 0
      %p398 = por %p396, %p397
      %s399 = ssub.s32 %s29, %s36
      %p400 = scmp.eq.s32.totalorder %s399, 0
      %s402 = sadd.s32 %s401, 1
      %s403 = scalar_select %p400, %s401, %s402
      %p406 = pneg %p400
      %p407 = scmp.eq.s32.totalorder %s29, 1
      %p408 = por %p406, %p407
      %p409 = scmp.ne.s32.totalorder %s401, %s404
      %p410 = scmp.eq.s32.totalorder %s29, 0
      %p411 = por %p409, %p410
      %p412 = scmp.ne.s32.totalorder %s401, %s404
      %p413 = scmp.eq.s32.totalorder %s34, 1
      %p414 = por %p412, %p413
      %p415 = scmp.ne.s32.totalorder %s404, %s405
      %p416 = scmp.eq.s32.totalorder %s34, 0
      %p417 = por %p415, %p416
      %p418 = scmp.ne.s32.totalorder %s404, %s405
      %p419 = scmp.eq.s32.totalorder %s35, 1
      %p420 = por %p418, %p419
      %p422 = scmp.ne.s32.totalorder %s405, %s421
      %p423 = scmp.eq.s32.totalorder %s35, 0
      %p424 = por %p422, %p423
      %p425 = scmp.le.s32.totalorder 1, %s29
      %p426 = scmp.lt.s32.totalorder %s29, 3
      %p427 = pnand %p425, %p426
      %p428 = pneg %p427
      // Predicated region
      $region9: #{tpu_custom_call.1} parent=5 // pred_check
        _
      $region10: #{tpu_custom_call.1} parent=5 // pred_check_branch
        %430 = sbr.rel (%p427) target = $region12
      $region11: #{tpu_custom_call.1} parent=5 // pred_region
        %s431 = ssub.s32 %s29, 1
        // Predicated region
        $region13: #{tpu_custom_call.1} parent=11 // pred_check
          %p432 = pneg %p76
        $region14: #{tpu_custom_call.1} parent=11 // pred_check_branch
          %434 = sbr.rel (%p432) target = $region16
        $region15: #{tpu_custom_call.1} parent=11 // pred_region
          _
        $region16: #{tpu_custom_call.1} parent=11 // pred_fallthru
          _
        // Predicated region
        $region17: #{tpu_custom_call.1} parent=11 // pred_check
          %p435 = pneg %p97
        $region18: #{tpu_custom_call.1} parent=11 // pred_check_branch
          %437 = sbr.rel (%p435) target = $region20
        $region19: #{tpu_custom_call.1} parent=11 // pred_region
          _
        $region20: #{tpu_custom_call.1} parent=11 // pred_fallthru
          _
        // Predicated region
        $region21: #{tpu_custom_call.1} parent=11 // pred_check
          %p438 = pneg %p118
        $region22: #{tpu_custom_call.1} parent=11 // pred_check_branch
          %440 = sbr.rel (%p438) target = $region24
        $region23: #{tpu_custom_call.1} parent=11 // pred_region
          %s442 = ssub.s32 16, 16
          %443 = vsyncadd [#allocation3], %s442
          %s445 = sshll.u32 [#allocation2], 4
          %s446 = int_to_ptr.vmem [resolvable:$true] %s445
          %448 = dma.hbm_to_vmem [thread:$0]  %s3, 16, %s446, [#allocation3]
        $region24: #{tpu_custom_call.1} parent=11 // pred_fallthru
          _
        // Predicated region
        $region25: #{tpu_custom_call.1} parent=11 // pred_check
          %p449 = pneg %p139
        $region26: #{tpu_custom_call.1} parent=11 // pred_check_branch
          %451 = sbr.rel (%p449) target = $region28
        $region27: #{tpu_custom_call.1} parent=11 // pred_region
          %s453 = ssub.s32 16, 16
          %454 = vsyncadd [#allocation6], %s453
          %s456 = sshll.u32 [#allocation5], 4
          %s457 = int_to_ptr.vmem [resolvable:$true] %s456
          %459 = dma.hbm_to_vmem [thread:$0]  %s4, 16, %s457, [#allocation6]
        $region28: #{tpu_custom_call.1} parent=11 // pred_fallthru
          _
        // Predicated region
        $region29: #{tpu_custom_call.1} parent=11 // pred_check
          %p460 = pneg %p160
        $region30: #{tpu_custom_call.1} parent=11 // pred_check_branch
          %462 = sbr.rel (%p460) target = $region32
        $region31: #{tpu_custom_call.1} parent=11 // pred_region
          _
        $region32: #{tpu_custom_call.1} parent=11 // pred_fallthru
          _
        // Predicated region
        $region33: #{tpu_custom_call.1} parent=11 // pred_check
          %p463 = pneg %p181
        $region34: #{tpu_custom_call.1} parent=11 // pred_check_branch
          %465 = sbr.rel (%p463) target = $region36
        $region35: #{tpu_custom_call.1} parent=11 // pred_region
          %s467 = ssub.s32 16, 16
          %468 = vsyncadd [#allocation6], %s467
          %s470 = sshll.u32 [#allocation7], 4
          %s471 = int_to_ptr.vmem [resolvable:$true] %s470
          %473 = dma.hbm_to_vmem [thread:$0]  %s6, 16, %s471, [#allocation6]
        $region36: #{tpu_custom_call.1} parent=11 // pred_fallthru
          _
        // Predicated region
        $region37: #{tpu_custom_call.1} parent=11 // pred_check
          %p474 = pneg %p202
        $region38: #{tpu_custom_call.1} parent=11 // pred_check_branch
          %476 = sbr.rel (%p474) target = $region40
        $region39: #{tpu_custom_call.1} parent=11 // pred_region
          %s478 = ssub.s32 16, 16
          %479 = vsyncadd [#allocation9], %s478
          %s481 = sshll.u32 [#allocation8], 4
          %s482 = int_to_ptr.vmem [resolvable:$true] %s481
          %484 = dma.hbm_to_vmem [thread:$0]  %s7, 16, %s482, [#allocation9]
        $region40: #{tpu_custom_call.1} parent=11 // pred_fallthru
          _
        // Predicated region
        $region41: #{tpu_custom_call.1} parent=11 // pred_check
          %p485 = pneg %p223
        $region42: #{tpu_custom_call.1} parent=11 // pred_check_branch
          %487 = sbr.rel (%p485) target = $region44
        $region43: #{tpu_custom_call.1} parent=11 // pred_region
          %s489 = ssub.s32 16, 16
          %490 = vsyncadd [#allocation9], %s489
          %s492 = sshll.u32 [#allocation10], 4
          %s493 = int_to_ptr.vmem [resolvable:$true] %s492
          %495 = dma.hbm_to_vmem [thread:$0]  %s8, 16, %s493, [#allocation9]
        $region44: #{tpu_custom_call.1} parent=11 // pred_fallthru
          _
        // Predicated region
        $region45: #{tpu_custom_call.1} parent=11 // pred_check
          %p496 = pneg %p244
        $region46: #{tpu_custom_call.1} parent=11 // pred_check_branch
          %498 = sbr.rel (%p496) target = $region48
        $region47: #{tpu_custom_call.1} parent=11 // pred_region
          _
        $region48: #{tpu_custom_call.1} parent=11 // pred_fallthru
          _
        // Predicated region
        $region49: #{tpu_custom_call.1} parent=11 // pred_check
          %p499 = pneg %p265
        $region50: #{tpu_custom_call.1} parent=11 // pred_check_branch
          %501 = sbr.rel (%p499) target = $region52
        $region51: #{tpu_custom_call.1} parent=11 // pred_region
          _
        $region52: #{tpu_custom_call.1} parent=11 // pred_fallthru
          _
        // Predicated region
        $region53: #{tpu_custom_call.1} parent=11 // pred_check
          %p502 = pneg %p286
        $region54: #{tpu_custom_call.1} parent=11 // pred_check_branch
          %504 = sbr.rel (%p502) target = $region56
        $region55: #{tpu_custom_call.1} parent=11 // pred_region
          _
        $region56: #{tpu_custom_call.1} parent=11 // pred_fallthru
          _
        // Predicated region
        $region57: #{tpu_custom_call.1} parent=11 // pred_check
          %p505 = pneg %p307
        $region58: #{tpu_custom_call.1} parent=11 // pred_check_branch
          %507 = sbr.rel (%p505) target = $region60
        $region59: #{tpu_custom_call.1} parent=11 // pred_region
          _
        $region60: #{tpu_custom_call.1} parent=11 // pred_fallthru
          _
        // Predicated region
        $region61: #{tpu_custom_call.1} parent=11 // pred_check
          %p508 = pneg %p328
        $region62: #{tpu_custom_call.1} parent=11 // pred_check_branch
          %510 = sbr.rel (%p508) target = $region64
        $region63: #{tpu_custom_call.1} parent=11 // pred_region
          _
        $region64: #{tpu_custom_call.1} parent=11 // pred_fallthru
          _
        // Predicated region
        $region65: #{tpu_custom_call.1} parent=11 // pred_check
          %p511 = pneg %p349
        $region66: #{tpu_custom_call.1} parent=11 // pred_check_branch
          %513 = sbr.rel (%p511) target = $region68
        $region67: #{tpu_custom_call.1} parent=11 // pred_region
          _
        $region68: #{tpu_custom_call.1} parent=11 // pred_fallthru
          _
        // Predicated region
        $region69: #{tpu_custom_call.1} parent=11 // pred_check
          %p514 = pneg %p370
        $region70: #{tpu_custom_call.1} parent=11 // pred_check_branch
          %516 = sbr.rel (%p514) target = $region72
        $region71: #{tpu_custom_call.1} parent=11 // pred_region
          _
        $region72: #{tpu_custom_call.1} parent=11 // pred_fallthru
          _
        // Predicated region
        $region73: #{tpu_custom_call.1} parent=11 // pred_check
          %p517 = pneg %p391
        $region74: #{tpu_custom_call.1} parent=11 // pred_check_branch
          %519 = sbr.rel (%p517) target = $region76
        $region75: #{tpu_custom_call.1} parent=11 // pred_region
          _
        $region76: #{tpu_custom_call.1} parent=11 // pred_fallthru
          _
      $region12: #{tpu_custom_call.1} parent=5 // pred_fallthru
        _
      %p520 = scmp.lt.s32.totalorder %s29, 2
      // Predicated region
      $region77: #{tpu_custom_call.1} parent=5 // pred_check
        %p521 = pneg %p520
      $region78: #{tpu_custom_call.1} parent=5 // pred_check_branch
        %523 = sbr.rel (%p521) target = $region80
      $region79: #{tpu_custom_call.1} parent=5 // pred_region
        // Predicated region
        $region81: #{tpu_custom_call.1} parent=79 // pred_check
          %p524 = pneg %p49
        $region82: #{tpu_custom_call.1} parent=79 // pred_check_branch
          %526 = sbr.rel (%p524) target = $region84
        $region83: #{tpu_custom_call.1} parent=79 // pred_region
          %s527 = smul.u32 2, %s29
          %p528 = scmp.lt.s32.totalorder %s527, 3
          %s529 = scalar_select %p528, %s527, 3
          %s530 = smul.addr %s529, 4
          %s531 = scalar_lea.vmem %s0, %s530
          %s532 = smul.u32 2, %s29
        $region84: #{tpu_custom_call.1} parent=79 // pred_fallthru
          _
      $region80: #{tpu_custom_call.1} parent=5 // pred_fallthru
        _
      %p533 = scmp.le.s32.totalorder 1, %s29
      %p534 = scmp.lt.s32.totalorder %s29, 3
      %p535 = pnand %p533, %p534
      %p536 = pneg %p535
      // Predicated region
      $region85: #{tpu_custom_call.1} parent=5 // pred_check
        _
      $region86: #{tpu_custom_call.1} parent=5 // pred_check_branch
        %538 = sbr.rel (%p535) target = $region88
      $region87: #{tpu_custom_call.1} parent=5 // pred_region
        %s539 = ssub.s32 %s29, 1
        // Predicated region
        $region89: #{tpu_custom_call.1} parent=87 // pred_check
          %p540 = pneg %p118
        $region90: #{tpu_custom_call.1} parent=87 // pred_check_branch
          %542 = sbr.rel (%p540) target = $region92
        $region91: #{tpu_custom_call.1} parent=87 // pred_region
          %543 = dma.done [#allocation3], 16
        $region92: #{tpu_custom_call.1} parent=87 // pred_fallthru
          _
        // Predicated region
        $region93: #{tpu_custom_call.1} parent=87 // pred_check
          %p544 = pneg %p139
        $region94: #{tpu_custom_call.1} parent=87 // pred_check_branch
          %546 = sbr.rel (%p544) target = $region96
        $region95: #{tpu_custom_call.1} parent=87 // pred_region
          %547 = dma.done [#allocation6], 16
        $region96: #{tpu_custom_call.1} parent=87 // pred_fallthru
          _
        // Predicated region
        $region97: #{tpu_custom_call.1} parent=87 // pred_check
          %p548 = pneg %p181
        $region98: #{tpu_custom_call.1} parent=87 // pred_check_branch
          %550 = sbr.rel (%p548) target = $region100
        $region99: #{tpu_custom_call.1} parent=87 // pred_region
          %551 = dma.done [#allocation6], 16
        $region100: #{tpu_custom_call.1} parent=87 // pred_fallthru
          _
        // Predicated region
        $region101: #{tpu_custom_call.1} parent=87 // pred_check
          %p552 = pneg %p202
        $region102: #{tpu_custom_call.1} parent=87 // pred_check_branch
          %554 = sbr.rel (%p552) target = $region104
        $region103: #{tpu_custom_call.1} parent=87 // pred_region
          %555 = dma.done [#allocation9], 16
        $region104: #{tpu_custom_call.1} parent=87 // pred_fallthru
          _
        // Predicated region
        $region105: #{tpu_custom_call.1} parent=87 // pred_check
          %p556 = pneg %p223
        $region106: #{tpu_custom_call.1} parent=87 // pred_check_branch
          %558 = sbr.rel (%p556) target = $region108
        $region107: #{tpu_custom_call.1} parent=87 // pred_region
          %559 = dma.done [#allocation9], 16
        $region108: #{tpu_custom_call.1} parent=87 // pred_fallthru
          _
        %s560 = smul.u32 2, %s34
        %p561 = scmp.lt.s32.totalorder %s560, 3
        %s562 = scalar_select %p561, %s560, 3
        %s563 = smul.addr %s562, 4
        %s564 = scalar_lea.vmem %s0, %s563
        %p565 = pneg %p55
        %p566 = pneg %p52
        %p567 = pneg %p76
        %p568 = pneg %p73
        %p569 = pneg %p97
        %p570 = pneg %p94
        %p571 = pneg %p118
        %p572 = pneg %p115
        %p573 = pneg %p139
        %p574 = pneg %p136
        %p575 = pneg %p160
        %p576 = pneg %p157
        %p577 = pneg %p181
        %p578 = pneg %p178
        %p579 = pneg %p202
        %p580 = pneg %p199
        %p581 = pneg %p223
        %p582 = pneg %p220
        %p583 = pneg %p244
        %p584 = pneg %p241
        %p585 = pneg %p265
        %p586 = pneg %p262
        %p587 = pneg %p286
        %p588 = pneg %p283
        %p589 = pneg %p307
        %p590 = pneg %p304
        %p591 = pneg %p328
        %p592 = pneg %p325
        %p593 = pneg %p349
        %p594 = pneg %p346
        %p595 = pneg %p370
        %p596 = pneg %p367
        %p597 = pneg %p391
        %p598 = pneg %p388
        %p599 = pneg %p417
        %p600 = pneg %p414
        %s601 = sand.u32 %s404, 1
        %s602 = scalar_lea.sflag [#allocation4], %s601
        %s603 = sand.u32 %s404, 1
        %s604 = smul.addr %s603, 16
        %s605 = scalar_lea.vmem [#allocation11], %s604
        %s606 = smul.u32 2, %s34
        %p607 = scmp.lt.s32.totalorder %s606, 3
        %s608 = scalar_select %p607, %s606, 3
        %s609 = smul.addr %s608, 4
        %s610 = scalar_lea.vmem %s0, %s609
        %s611 = smul.u32 2, %s34
        %s612 = smul.u32 2, %s34
        %v614 = vld [vmem:[%s610] sm:$0xf]
        %v615 = vld [vmem:[%s610 + $0x4] sm:$0xf]
        %v616 = vld [vmem:[%s1] sm:$0x3]
        %v617 = vld [vmem:[%s2] sm:$0x1]
        %v619 = vlaneseq
        %v620 = vshrl.u32 %v619, 7
        %v621 = vsub.s32 0, %v620
        %v622 = vrot.slane %v617, %v621
        %v626 = vunpack.c.l.b16 %v614
        %v627 = vunpack.c.l.b16 %v615
        %v628 = vpack.c.b16 %v627, %v626
        %vm629 = vcmask 31744
        %v631 = vsel %vm629, %v628, 0
        %vm633 = vcmask 1041408
        %v635 = vsel %vm633, %v616, 0
        %637 = vmatprep.subr.bf16.mxu0 0
        %638 = vmatpush1.bf16.msra.mxu0 0
        %639 = vmatprep.subr.bf16.mxu0 0
        %640 = vmatpush1.bf16.msra.mxu0 0
        %641 = vmatprep.subr.bf16.mxu0 0
        %642 = vmatpush1.bf16.msra.mxu0 0
        %643 = vmatprep.subr.bf16.mxu0 0
        %644 = vmatpush1.bf16.msra.mxu0 0
        %645 = vmatprep.subr.bf16.mxu0 0
        %646 = vmatpush1.bf16.msra.mxu0 0
        %647 = vmatprep.subr.bf16.mxu0 0
        %648 = vmatpush1.bf16.msra.mxu0 0
        %649 = vmatprep.subr.bf16.mxu0 0
        %650 = vmatpush1.bf16.msra.mxu0 0
        %651 = vmatprep.subr.bf16.mxu0 0
        %652 = vmatpush1.bf16.msra.mxu0 %v635
        %653 = vmatprep.subr.bf16.mxu0 0
        %654 = vmatpush2.bf16.msra.mxu0 0
        %655 = vmatprep.subr.bf16.mxu0 0
        %656 = vmatpush2.bf16.msra.mxu0 0
        %657 = vmatprep.subr.bf16.mxu0 0
        %658 = vmatpush2.bf16.msra.mxu0 0
        %659 = vmatprep.subr.bf16.mxu0 0
        %660 = vmatpush2.bf16.msra.mxu0 0
        %661 = vmatprep.subr.bf16.mxu0 0
        %662 = vmatpush2.bf16.msra.mxu0 0
        %663 = vmatprep.subr.bf16.mxu0 0
        %664 = vmatpush2.bf16.msra.mxu0 0
        %665 = vmatprep.subr.bf16.mxu0 0
        %666 = vmatpush2.bf16.msra.mxu0 0
        %667 = vmatprep.subr.bf16.mxu0 0
        %668 = vmatpush2.bf16.msra.mxu0 0
        %669 = vmatprep.mubr.bf16.mxu0 0
        %670 = vmatmul.mubr.bf16.gmra.mxu0 %v631
        %v671 = vpop.f32.mrf.mxu0
        %v672 = vadd.f32 %v622, %v671
        %v673 = vpop.f32.mrf.mxu0
        %v674 = vpop.f32.mrf.mxu0
        %v675 = vadd.f32 %v622, %v674
        %v676 = vpop.f32.mrf.mxu0
        %677 = vdwg.mxu0
        %v678 = vld [vmem:[#allocation2] sm:$0x1]
        %v679 = vld [vmem:[#allocation5] sm:$0x1]
        %v680 = vmul.f32 %v672, %v672
        %v681 = vmul.f32 %v675, %v675
        %vm682 = vcmask 523264
        %v683 = vsel %vm682, %v680, 0.0
        %684 = vadd.xlane.f32.xlu0 %v683
        %v685 = vpop.xlane.xlu0 %684
        %v686 = vsel %vm682, %v681, 0.0
        %687 = vadd.xlane.f32.xlu0 %v686
        %v688 = vpop.xlane.xlu0 %687
        %v689 = vrcp.pop 64.0
        %v690 = vmul.f32 %v685, %v689
        %v691 = vmul.f32 %v688, %v689
        %v692 = vadd.f32 %v690, 1e-05
        %v693 = vadd.f32 %v691, 1e-05
        %v694 = vrsqrt.pop %v692
        %v695 = vrsqrt.pop %v693
        %v696 = vmul.f32 %v672, %v694
        %v697 = vmul.f32 %v675, %v695
        %v699 = vlaneseq
        %v700 = vshrl.u32 %v699, 7
        %v701 = vsub.s32 0, %v700
        %v702 = vrot.slane %v678, %v701
        %v704 = vmul.f32 %v696, %v702
        %v705 = vmul.f32 %v697, %v702
        %v707 = vlaneseq
        %v708 = vshrl.u32 %v707, 7
        %v709 = vsub.s32 0, %v708
        %v710 = vrot.slane %v679, %v709
        %v712 = vadd.f32 %v704, %v710
        %v713 = vadd.f32 %v705, %v710
        %v714 = vmax.f32 %v712, 0.0
        %v715 = vmax.f32 %v713, 0.0
        %v716 = vpack.c.bf16 %v715, %v714
        %v717 = vld [vmem:[%s5] sm:$0xf]
        %v718 = vld [vmem:[%s5 + $0x4] sm:$0xf]
        %v719 = vld [vmem:[%s5 + $0x8] sm:$0xf]
        %v720 = vld [vmem:[%s5 + $0xc] sm:$0xf]
        %v721 = vld [vmem:[%s5 + $0x10] sm:$0xf]
        %v722 = vld [vmem:[%s5 + $0x14] sm:$0xf]
        %v723 = vld [vmem:[%s5 + $0x18] sm:$0xf]
        %v724 = vld [vmem:[%s5 + $0x1c] sm:$0xf]
        %v725 = vld [vmem:[#allocation7] sm:$0x1]
        %v727 = vlaneseq
        %v728 = vshrl.u32 %v727, 7
        %v729 = vsub.s32 0, %v728
        %v730 = vrot.slane %v725, %v729
        %v740 = vunpack.c.l.b16 %v717
        %v741 = vunpack.c.l.b16 %v718
        %v742 = vunpack.c.l.b16 %v719
        %v743 = vunpack.c.l.b16 %v720
        %v744 = vunpack.c.l.b16 %v721
        %v745 = vunpack.c.l.b16 %v722
        %v746 = vunpack.c.l.b16 %v723
        %v747 = vunpack.c.l.b16 %v724
        %v748 = vpack.c.b16 %v741, %v740
        %v749 = vpack.c.b16 %v743, %v742
        %v750 = vpack.c.b16 %v745, %v744
        %v751 = vpack.c.b16 %v747, %v746
        %v757 = vsel %vm682, %v716, 0
        %759 = vmatprep.subr.bf16.mxu0 0
        %760 = vmatpush1.bf16.msra.mxu0 0
        %761 = vmatprep.subr.bf16.mxu0 0
        %762 = vmatpush1.bf16.msra.mxu0 0
        %763 = vmatprep.subr.bf16.mxu0 0
        %764 = vmatpush1.bf16.msra.mxu0 0
        %765 = vmatprep.subr.bf16.mxu0 0
        %766 = vmatpush1.bf16.msra.mxu0 0
        %767 = vmatprep.subr.bf16.mxu0 0
        %768 = vmatpush1.bf16.msra.mxu0 %v751
        %769 = vmatprep.subr.bf16.mxu0 0
        %770 = vmatpush1.bf16.msra.mxu0 %v750
        %771 = vmatprep.subr.bf16.mxu0 0
        %772 = vmatpush1.bf16.msra.mxu0 %v749
        %773 = vmatprep.subr.bf16.mxu0 0
        %774 = vmatpush1.bf16.msra.mxu0 %v748
        %775 = vmatprep.subr.bf16.mxu0 0
        %776 = vmatpush2.bf16.msra.mxu0 0
        %777 = vmatprep.subr.bf16.mxu0 0
        %778 = vmatpush2.bf16.msra.mxu0 0
        %779 = vmatprep.subr.bf16.mxu0 0
        %780 = vmatpush2.bf16.msra.mxu0 0
        %781 = vmatprep.subr.bf16.mxu0 0
        %782 = vmatpush2.bf16.msra.mxu0 0
        %783 = vmatprep.subr.bf16.mxu0 0
        %784 = vmatpush2.bf16.msra.mxu0 0
        %785 = vmatprep.subr.bf16.mxu0 0
        %786 = vmatpush2.bf16.msra.mxu0 0
        %787 = vmatprep.subr.bf16.mxu0 0
        %788 = vmatpush2.bf16.msra.mxu0 0
        %789 = vmatprep.subr.bf16.mxu0 0
        %790 = vmatpush2.bf16.msra.mxu0 0
        %791 = vmatprep.mubr.bf16.mxu0 0
        %792 = vmatmul.mubr.bf16.gmra.mxu0 %v757
        %v793 = vpop.f32.mrf.mxu0
        %v794 = vadd.f32 %v730, %v793
        %v795 = vpop.f32.mrf.mxu0
        %v796 = vpop.f32.mrf.mxu0
        %v797 = vadd.f32 %v730, %v796
        %v798 = vpop.f32.mrf.mxu0
        %799 = vdwg.mxu0
        %v800 = vld [vmem:[#allocation8] sm:$0x1]
        %v801 = vld [vmem:[#allocation10] sm:$0x1]
        %v802 = vmul.f32 %v794, %v794
        %v803 = vmul.f32 %v797, %v797
        %804 = vadd.xlane.f32.xlu0 %v802
        %v805 = vpop.xlane.xlu0 %804
        %806 = vadd.xlane.f32.xlu0 %v803
        %v807 = vpop.xlane.xlu0 %806
        %v808 = vrcp.pop 128.0
        %v809 = vmul.f32 %v805, %v808
        %v810 = vmul.f32 %v807, %v808
        %v811 = vadd.f32 %v809, 1e-05
        %v812 = vadd.f32 %v810, 1e-05
        %v813 = vrsqrt.pop %v811
        %v814 = vrsqrt.pop %v812
        %v815 = vmul.f32 %v794, %v813
        %v816 = vmul.f32 %v797, %v814
        %v818 = vlaneseq
        %v819 = vshrl.u32 %v818, 7
        %v820 = vsub.s32 0, %v819
        %v821 = vrot.slane %v800, %v820
        %v823 = vmul.f32 %v815, %v821
        %v824 = vmul.f32 %v816, %v821
        %v826 = vlaneseq
        %v827 = vshrl.u32 %v826, 7
        %v828 = vsub.s32 0, %v827
        %v829 = vrot.slane %v801, %v828
        %v831 = vadd.f32 %v823, %v829
        %v832 = vadd.f32 %v824, %v829
        %v833 = vmax.f32 %v831, 0.0
        %v834 = vmax.f32 %v832, 0.0
        %v835 = vpack.c.bf16 %v834, %v833
        %v836 = vld [vmem:[%s9] sm:$0xff]
        %v837 = vld [vmem:[%s9 + $0x8] sm:$0xff]
        %v838 = vld [vmem:[%s9 + $0x10] sm:$0xff]
        %v839 = vld [vmem:[%s9 + $0x18] sm:$0xff]
        %v840 = vld [vmem:[%s9 + $0x20] sm:$0xff]
        %v841 = vld [vmem:[%s9 + $0x28] sm:$0xff]
        %v842 = vld [vmem:[%s9 + $0x30] sm:$0xff]
        %v843 = vld [vmem:[%s9 + $0x38] sm:$0xff]
        %v844 = vld [vmem:[%s9 + $0x40] sm:$0xff]
        %v845 = vld [vmem:[%s9 + $0x48] sm:$0xff]
        %v846 = vld [vmem:[%s9 + $0x50] sm:$0xff]
        %v847 = vld [vmem:[%s9 + $0x58] sm:$0xff]
        %v848 = vld [vmem:[%s9 + $0x60] sm:$0xff]
        %v849 = vld [vmem:[%s9 + $0x68] sm:$0xff]
        %v850 = vld [vmem:[%s9 + $0x70] sm:$0xff]
        %v851 = vld [vmem:[%s9 + $0x78] sm:$0xff]
        %v852 = vld [vmem:[%s10] sm:$0x3]
        %v854 = vlaneseq
        %v855 = vshrl.u32 %v854, 7
        %v856 = vsub.s32 0, %v855
        %v857 = vrot.slane %v852, %v856
        %v858 = vlaneseq
        %v859 = vshrl.u32 %v858, 7
        %v860 = vsub.s32 1, %v859
        %v861 = vrot.slane %v852, %v860
        %v880 = vunpack.c.l.b16 %v836
        %v881 = vunpack.c.h.b16 %v836
        %v882 = vunpack.c.l.b16 %v837
        %v883 = vunpack.c.h.b16 %v837
        %v884 = vunpack.c.l.b16 %v838
        %v885 = vunpack.c.h.b16 %v838
        %v886 = vunpack.c.l.b16 %v839
        %v887 = vunpack.c.h.b16 %v839
        %v888 = vunpack.c.l.b16 %v840
        %v889 = vunpack.c.h.b16 %v840
        %v890 = vunpack.c.l.b16 %v841
        %v891 = vunpack.c.h.b16 %v841
        %v892 = vunpack.c.l.b16 %v842
        %v893 = vunpack.c.h.b16 %v842
        %v894 = vunpack.c.l.b16 %v843
        %v895 = vunpack.c.h.b16 %v843
        %v896 = vunpack.c.l.b16 %v844
        %v897 = vunpack.c.h.b16 %v844
        %v898 = vunpack.c.l.b16 %v845
        %v899 = vunpack.c.h.b16 %v845
        %v900 = vunpack.c.l.b16 %v846
        %v901 = vunpack.c.h.b16 %v846
        %v902 = vunpack.c.l.b16 %v847
        %v903 = vunpack.c.h.b16 %v847
        %v904 = vunpack.c.l.b16 %v848
        %v905 = vunpack.c.h.b16 %v848
        %v906 = vunpack.c.l.b16 %v849
        %v907 = vunpack.c.h.b16 %v849
        %v908 = vunpack.c.l.b16 %v850
        %v909 = vunpack.c.h.b16 %v850
        %v910 = vunpack.c.l.b16 %v851
        %v911 = vunpack.c.h.b16 %v851
        %v912 = vpack.c.b16 %v882, %v880
        %v913 = vpack.c.b16 %v883, %v881
        %v914 = vpack.c.b16 %v886, %v884
        %v915 = vpack.c.b16 %v887, %v885
        %v916 = vpack.c.b16 %v890, %v888
        %v917 = vpack.c.b16 %v891, %v889
        %v918 = vpack.c.b16 %v894, %v892
        %v919 = vpack.c.b16 %v895, %v893
        %v920 = vpack.c.b16 %v898, %v896
        %v921 = vpack.c.b16 %v899, %v897
        %v922 = vpack.c.b16 %v902, %v900
        %v923 = vpack.c.b16 %v903, %v901
        %v924 = vpack.c.b16 %v906, %v904
        %v925 = vpack.c.b16 %v907, %v905
        %v926 = vpack.c.b16 %v910, %v908
        %v927 = vpack.c.b16 %v911, %v909
        %944 = vmatprep.subr.bf16.mxu0 %v927
        %945 = vmatpush1.bf16.msra.mxu0 %v926
        %946 = vmatprep.subr.bf16.mxu0 %v925
        %947 = vmatpush1.bf16.msra.mxu0 %v924
        %948 = vmatprep.subr.bf16.mxu0 %v923
        %949 = vmatpush1.bf16.msra.mxu0 %v922
        %950 = vmatprep.subr.bf16.mxu0 %v921
        %951 = vmatpush1.bf16.msra.mxu0 %v920
        %952 = vmatprep.subr.bf16.mxu0 %v919
        %953 = vmatpush1.bf16.msra.mxu0 %v918
        %954 = vmatprep.subr.bf16.mxu0 %v917
        %955 = vmatpush1.bf16.msra.mxu0 %v916
        %956 = vmatprep.subr.bf16.mxu0 %v915
        %957 = vmatpush1.bf16.msra.mxu0 %v914
        %958 = vmatprep.subr.bf16.mxu0 %v913
        %959 = vmatpush1.bf16.msra.mxu0 %v912
        %960 = vmatprep.subr.bf16.mxu0 0
        %961 = vmatpush2.bf16.msra.mxu0 0
        %962 = vmatprep.subr.bf16.mxu0 0
        %963 = vmatpush2.bf16.msra.mxu0 0
        %964 = vmatprep.subr.bf16.mxu0 0
        %965 = vmatpush2.bf16.msra.mxu0 0
        %966 = vmatprep.subr.bf16.mxu0 0
        %967 = vmatpush2.bf16.msra.mxu0 0
        %968 = vmatprep.subr.bf16.mxu0 0
        %969 = vmatpush2.bf16.msra.mxu0 0
        %970 = vmatprep.subr.bf16.mxu0 0
        %971 = vmatpush2.bf16.msra.mxu0 0
        %972 = vmatprep.subr.bf16.mxu0 0
        %973 = vmatpush2.bf16.msra.mxu0 0
        %974 = vmatprep.subr.bf16.mxu0 0
        %975 = vmatpush2.bf16.msra.mxu0 0
        %976 = vmatprep.mubr.bf16.mxu0 0
        %977 = vmatmul.mubr.bf16.gmra.mxu0 %v835
        %v978 = vpop.f32.mrf.mxu0
        %v979 = vadd.f32 %v857, %v978
        %v980 = vpop.f32.mrf.mxu0
        %v981 = vadd.f32 %v861, %v980
        %v982 = vpop.f32.mrf.mxu0
        %v983 = vadd.f32 %v857, %v982
        %v984 = vpop.f32.mrf.mxu0
        %v985 = vadd.f32 %v861, %v984
        %986 = vdwg.mxu0
        %v987 = vld [vmem:[%s11] sm:$0x3]
        %v988 = vld [vmem:[%s12] sm:$0x3]
        %v989 = vmul.f32 %v979, %v979
        %v990 = vmul.f32 %v981, %v981
        %v991 = vmul.f32 %v983, %v983
        %v992 = vmul.f32 %v985, %v985
        %v993 = vadd.f32 %v989, %v990
        %994 = vadd.xlane.f32.xlu0 %v993
        %v995 = vpop.xlane.xlu0 %994
        %v996 = vadd.f32 %v991, %v992
        %997 = vadd.xlane.f32.xlu0 %v996
        %v998 = vpop.xlane.xlu0 %997
        %v999 = vrcp.pop 256.0
        %v1000 = vmul.f32 %v995, %v999
        %v1001 = vmul.f32 %v998, %v999
        %v1002 = vadd.f32 %v1000, 1e-05
        %v1003 = vadd.f32 %v1001, 1e-05
        %v1004 = vrsqrt.pop %v1002
        %v1005 = vrsqrt.pop %v1003
        %v1006 = vmul.f32 %v979, %v1004
        %v1007 = vmul.f32 %v981, %v1004
        %v1008 = vmul.f32 %v983, %v1005
        %v1009 = vmul.f32 %v985, %v1005
        %v1011 = vlaneseq
        %v1012 = vshrl.u32 %v1011, 7
        %v1013 = vsub.s32 0, %v1012
        %v1014 = vrot.slane %v987, %v1013
        %v1015 = vlaneseq
        %v1016 = vshrl.u32 %v1015, 7
        %v1017 = vsub.s32 1, %v1016
        %v1018 = vrot.slane %v987, %v1017
        %v1021 = vmul.f32 %v1006, %v1014
        %v1022 = vmul.f32 %v1007, %v1018
        %v1023 = vmul.f32 %v1008, %v1014
        %v1024 = vmul.f32 %v1009, %v1018
        %v1026 = vlaneseq
        %v1027 = vshrl.u32 %v1026, 7
        %v1028 = vsub.s32 0, %v1027
        %v1029 = vrot.slane %v988, %v1028
        %v1030 = vlaneseq
        %v1031 = vshrl.u32 %v1030, 7
        %v1032 = vsub.s32 1, %v1031
        %v1033 = vrot.slane %v988, %v1032
        %v1036 = vadd.f32 %v1021, %v1029
        %v1037 = vadd.f32 %v1022, %v1033
        %v1038 = vadd.f32 %v1023, %v1029
        %v1039 = vadd.f32 %v1024, %v1033
        %v1040 = vmax.f32 %v1036, 0.0
        %v1041 = vmax.f32 %v1037, 0.0
        %v1042 = vmax.f32 %v1038, 0.0
        %v1043 = vmax.f32 %v1039, 0.0
        %v1044 = vpack.c.bf16 %v1042, %v1040
        %v1045 = vpack.c.bf16 %v1043, %v1041
        %v1046 = vld [vmem:[%s13] sm:$0xf]
        %v1047 = vld [vmem:[%s13 + $0x4] sm:$0xf]
        %v1048 = vld [vmem:[%s13 + $0x8] sm:$0xf]
        %v1049 = vld [vmem:[%s13 + $0xc] sm:$0xf]
        %v1050 = vld [vmem:[%s13 + $0x10] sm:$0xf]
        %v1051 = vld [vmem:[%s13 + $0x14] sm:$0xf]
        %v1052 = vld [vmem:[%s13 + $0x18] sm:$0xf]
        %v1053 = vld [vmem:[%s13 + $0x1c] sm:$0xf]
        %v1054 = vld [vmem:[%s13 + $0x20] sm:$0xf]
        %v1055 = vld [vmem:[%s13 + $0x24] sm:$0xf]
        %v1056 = vld [vmem:[%s13 + $0x28] sm:$0xf]
        %v1057 = vld [vmem:[%s13 + $0x2c] sm:$0xf]
        %v1058 = vld [vmem:[%s13 + $0x30] sm:$0xf]
        %v1059 = vld [vmem:[%s13 + $0x34] sm:$0xf]
        %v1060 = vld [vmem:[%s13 + $0x38] sm:$0xf]
        %v1061 = vld [vmem:[%s13 + $0x3c] sm:$0xf]
        %v1062 = vld [vmem:[%s13 + $0x40] sm:$0xf]
        %v1063 = vld [vmem:[%s13 + $0x44] sm:$0xf]
        %v1064 = vld [vmem:[%s13 + $0x48] sm:$0xf]
        %v1065 = vld [vmem:[%s13 + $0x4c] sm:$0xf]
        %v1066 = vld [vmem:[%s13 + $0x50] sm:$0xf]
        %v1067 = vld [vmem:[%s13 + $0x54] sm:$0xf]
        %v1068 = vld [vmem:[%s13 + $0x58] sm:$0xf]
        %v1069 = vld [vmem:[%s13 + $0x5c] sm:$0xf]
        %v1070 = vld [vmem:[%s13 + $0x60] sm:$0xf]
        %v1071 = vld [vmem:[%s13 + $0x64] sm:$0xf]
        %v1072 = vld [vmem:[%s13 + $0x68] sm:$0xf]
        %v1073 = vld [vmem:[%s13 + $0x6c] sm:$0xf]
        %v1074 = vld [vmem:[%s13 + $0x70] sm:$0xf]
        %v1075 = vld [vmem:[%s13 + $0x74] sm:$0xf]
        %v1076 = vld [vmem:[%s13 + $0x78] sm:$0xf]
        %v1077 = vld [vmem:[%s13 + $0x7c] sm:$0xf]
        %v1078 = vld [vmem:[%s14] sm:$0x1]
        %v1080 = vlaneseq
        %v1081 = vshrl.u32 %v1080, 7
        %v1082 = vsub.s32 0, %v1081
        %v1083 = vrot.slane %v1078, %v1082
        %v1117 = vunpack.c.l.b16 %v1046
        %v1118 = vunpack.c.l.b16 %v1047
        %v1119 = vunpack.c.l.b16 %v1048
        %v1120 = vunpack.c.l.b16 %v1049
        %v1121 = vunpack.c.l.b16 %v1050
        %v1122 = vunpack.c.l.b16 %v1051
        %v1123 = vunpack.c.l.b16 %v1052
        %v1124 = vunpack.c.l.b16 %v1053
        %v1125 = vunpack.c.l.b16 %v1054
        %v1126 = vunpack.c.l.b16 %v1055
        %v1127 = vunpack.c.l.b16 %v1056
        %v1128 = vunpack.c.l.b16 %v1057
        %v1129 = vunpack.c.l.b16 %v1058
        %v1130 = vunpack.c.l.b16 %v1059
        %v1131 = vunpack.c.l.b16 %v1060
        %v1132 = vunpack.c.l.b16 %v1061
        %v1133 = vunpack.c.l.b16 %v1062
        %v1134 = vunpack.c.l.b16 %v1063
        %v1135 = vunpack.c.l.b16 %v1064
        %v1136 = vunpack.c.l.b16 %v1065
        %v1137 = vunpack.c.l.b16 %v1066
        %v1138 = vunpack.c.l.b16 %v1067
        %v1139 = vunpack.c.l.b16 %v1068
        %v1140 = vunpack.c.l.b16 %v1069
        %v1141 = vunpack.c.l.b16 %v1070
        %v1142 = vunpack.c.l.b16 %v1071
        %v1143 = vunpack.c.l.b16 %v1072
        %v1144 = vunpack.c.l.b16 %v1073
        %v1145 = vunpack.c.l.b16 %v1074
        %v1146 = vunpack.c.l.b16 %v1075
        %v1147 = vunpack.c.l.b16 %v1076
        %v1148 = vunpack.c.l.b16 %v1077
        %v1149 = vpack.c.b16 %v1118, %v1117
        %v1150 = vpack.c.b16 %v1120, %v1119
        %v1151 = vpack.c.b16 %v1122, %v1121
        %v1152 = vpack.c.b16 %v1124, %v1123
        %v1153 = vpack.c.b16 %v1126, %v1125
        %v1154 = vpack.c.b16 %v1128, %v1127
        %v1155 = vpack.c.b16 %v1130, %v1129
        %v1156 = vpack.c.b16 %v1132, %v1131
        %v1157 = vpack.c.b16 %v1134, %v1133
        %v1158 = vpack.c.b16 %v1136, %v1135
        %v1159 = vpack.c.b16 %v1138, %v1137
        %v1160 = vpack.c.b16 %v1140, %v1139
        %v1161 = vpack.c.b16 %v1142, %v1141
        %v1162 = vpack.c.b16 %v1144, %v1143
        %v1163 = vpack.c.b16 %v1146, %v1145
        %v1164 = vpack.c.b16 %v1148, %v1147
        %1181 = vmatprep.subr.bf16.mxu0 0
        %1182 = vmatpush1.bf16.msra.mxu0 %v1156
        %1183 = vmatprep.subr.bf16.mxu0 0
        %1184 = vmatpush1.bf16.msra.mxu0 %v1155
        %1185 = vmatprep.subr.bf16.mxu0 0
        %1186 = vmatpush1.bf16.msra.mxu0 %v1154
        %1187 = vmatprep.subr.bf16.mxu0 0
        %1188 = vmatpush1.bf16.msra.mxu0 %v1153
        %1189 = vmatprep.subr.bf16.mxu0 0
        %1190 = vmatpush1.bf16.msra.mxu0 %v1152
        %1191 = vmatprep.subr.bf16.mxu0 0
        %1192 = vmatpush1.bf16.msra.mxu0 %v1151
        %1193 = vmatprep.subr.bf16.mxu0 0
        %1194 = vmatpush1.bf16.msra.mxu0 %v1150
        %1195 = vmatprep.subr.bf16.mxu0 0
        %1196 = vmatpush1.bf16.msra.mxu0 %v1149
        %1197 = vmatprep.subr.bf16.mxu0 0
        %1198 = vmatpush2.bf16.msra.mxu0 %v1164
        %1199 = vmatprep.subr.bf16.mxu0 0
        %1200 = vmatpush2.bf16.msra.mxu0 %v1163
        %1201 = vmatprep.subr.bf16.mxu0 0
        %1202 = vmatpush2.bf16.msra.mxu0 %v1162
        %1203 = vmatprep.subr.bf16.mxu0 0
        %1204 = vmatpush2.bf16.msra.mxu0 %v1161
        %1205 = vmatprep.subr.bf16.mxu0 0
        %1206 = vmatpush2.bf16.msra.mxu0 %v1160
        %1207 = vmatprep.subr.bf16.mxu0 0
        %1208 = vmatpush2.bf16.msra.mxu0 %v1159
        %1209 = vmatprep.subr.bf16.mxu0 0
        %1210 = vmatpush2.bf16.msra.mxu0 %v1158
        %1211 = vmatprep.subr.bf16.mxu0 0
        %1212 = vmatpush2.bf16.msra.mxu0 %v1157
        %1213 = vmatprep.mubr.bf16.mxu0 %v1045
        %1214 = vmatmul.mubr.bf16.gmra.mxu0 %v1044
        %v1215 = vpop.f32.mrf.mxu0
        %v1216 = vadd.f32 %v1083, %v1215
        %v1217 = vpop.f32.mrf.mxu0
        %v1218 = vpop.f32.mrf.mxu0
        %v1219 = vadd.f32 %v1083, %v1218
        %v1220 = vpop.f32.mrf.mxu0
        %1221 = vdwg.mxu0
        %v1222 = vld [vmem:[%s15] sm:$0x1]
        %v1223 = vld [vmem:[%s16] sm:$0x1]
        %v1224 = vmul.f32 %v1216, %v1216
        %v1225 = vmul.f32 %v1219, %v1219
        %vm1226 = vcmask 261120
        %v1227 = vsel %vm1226, %v1224, 0.0
        %1228 = vadd.xlane.f32.xlu0 %v1227
        %v1229 = vpop.xlane.xlu0 %1228
        %v1230 = vsel %vm1226, %v1225, 0.0
        %1231 = vadd.xlane.f32.xlu0 %v1230
        %v1232 = vpop.xlane.xlu0 %1231
        %v1233 = vrcp.pop 32.0
        %v1234 = vmul.f32 %v1229, %v1233
        %v1235 = vmul.f32 %v1232, %v1233
        %v1236 = vadd.f32 %v1234, 1e-05
        %v1237 = vadd.f32 %v1235, 1e-05
        %v1238 = vrsqrt.pop %v1236
        %v1239 = vrsqrt.pop %v1237
        %v1240 = vmul.f32 %v1216, %v1238
        %v1241 = vmul.f32 %v1219, %v1239
        %v1243 = vlaneseq
        %v1244 = vshrl.u32 %v1243, 7
        %v1245 = vsub.s32 0, %v1244
        %v1246 = vrot.slane %v1222, %v1245
        %v1248 = vmul.f32 %v1240, %v1246
        %v1249 = vmul.f32 %v1241, %v1246
        %v1251 = vlaneseq
        %v1252 = vshrl.u32 %v1251, 7
        %v1253 = vsub.s32 0, %v1252
        %v1254 = vrot.slane %v1223, %v1253
        %v1256 = vadd.f32 %v1248, %v1254
        %v1257 = vadd.f32 %v1249, %v1254
        %1258 = vst.msk [vmem:[%s605] sm:$0xff] %vm1226, %v1256
        %1259 = vst.msk [vmem:[%s605 + $0x8] sm:$0xff] %vm1226, %v1257
        %s1260 = sand.u32 %s404, 1
        %s1261 = scalar_lea.sflag [#allocation4], %s1260
        %s1262 = sand.u32 %s404, 1
        %s1263 = smul.addr %s1262, 16
        %s1264 = scalar_lea.vmem [#allocation11], %s1263
        // Predicated region
        $region109: #{tpu_custom_call.1} parent=87 // pred_check
          %p1265 = pneg %p414
        $region110: #{tpu_custom_call.1} parent=87 // pred_check_branch
          %1267 = sbr.rel (%p1265) target = $region112
        $region111: #{tpu_custom_call.1} parent=87 // pred_region
          %s1268 = smul.u32 2, %s34
          %s1270 = ssub.s32 256, 256
          %1271 = vsyncadd %s1261, %s1270
          %s1272 = smul.addr %s1268, 128
          %s1273 = scalar_lea.hbm %s17, %s1272
          %s1274 = sshll.u32 %s1264, 4
          %s1275 = int_to_ptr.vmem [resolvable:$true] %s1274
          %1280 = dma.vmem_to_hbm [thread:$0]  %s1275, 256, %s1273, %s1261, 128, 128, 8
        $region112: #{tpu_custom_call.1} parent=87 // pred_fallthru
          _
      $region88: #{tpu_custom_call.1} parent=5 // pred_fallthru
        _
      %p1281 = scmp.le.s32.totalorder 2, %s29
      // Predicated region
      $region113: #{tpu_custom_call.1} parent=5 // pred_check
        %p1282 = pneg %p1281
      $region114: #{tpu_custom_call.1} parent=5 // pred_check_branch
        %1284 = sbr.rel (%p1282) target = $region116
      $region115: #{tpu_custom_call.1} parent=5 // pred_region
        %s1285 = ssub.s32 %s29, 2
        // Predicated region
        $region117: #{tpu_custom_call.1} parent=115 // pred_check
          %p1286 = pneg %p420
        $region118: #{tpu_custom_call.1} parent=115 // pred_check_branch
          %1288 = sbr.rel (%p1286) target = $region120
        $region119: #{tpu_custom_call.1} parent=115 // pred_region
          %s1289 = sand.u32 %s405, 1
          %s1290 = scalar_lea.sflag [#allocation4], %s1289
          %s1291 = sand.u32 %s405, 1
          %s1292 = smul.addr %s1291, 16
          %s1293 = scalar_lea.vmem [#allocation11], %s1292
          %1294 = dma.done %s1290, 256
        $region120: #{tpu_custom_call.1} parent=115 // pred_fallthru
          _
      $region116: #{tpu_custom_call.1} parent=5 // pred_fallthru
        _
    $region6: #{tpu_custom_call.1} parent=1 // loop_footer
      %s33 = sadd.s32 1, %s29
    $region7: #{tpu_custom_call.1} parent=1 // loop_footer_branch
      %28 = sbr.rel target = $region3
    $region8: #{tpu_custom_call.1} parent=1 // loop_exit
      _
    %1295 = vsyncpa [#allocation3], 1
    %s1296 = scalar_lea.sflag [#allocation3], 1
    %1297 = vsyncpa %s1296, 1
    %1298 = vsyncpa [#allocation6], 1
    %1299 = vsyncpa [#allocation9], 1
    %1300 = vsyncpa [#allocation4], 1
    %s1301 = scalar_lea.sflag [#allocation4], 1
    %1302 = vsyncpa %s1301, 1

</llo_original>
